<compile_context>
chip_gen: v5e
topology: v5e:2x2
jax: 0.10.0
libtpu: 0.0.40
codegen_flags: <defaults>
</compile_context>

<pallas_src>
import functools

import jax
import jax.numpy as jnp
from jax.experimental import pallas as pl
from jax.experimental.pallas import tpu as pltpu


def _distill_kernel(pred_ref, gt_ref, out_ref, acc_ref, *,
                    inv_t, n_spatial, tile_lanes):
    ti = pl.program_id(1)

    @pl.when(ti == 0)
    def _():
        acc_ref[...] = jnp.zeros_like(acc_ref)

    p = pred_ref[...].astype(jnp.float32) * inv_t     # (1, C, T) student / T
    g = gt_ref[...].astype(jnp.float32) * inv_t       # (1, C, T) teacher / T

    # Student log-sum-exp over the channel (sublane) axis.
    p_max = jnp.max(p, axis=1, keepdims=True)         # (1, 1, T)
    p_shift = p - p_max
    p_lse = jnp.log(jnp.sum(jnp.exp(p_shift), axis=1, keepdims=True))

    # Teacher unnormalized softmax terms.
    g_exp = jnp.exp(g - jnp.max(g, axis=1, keepdims=True))   # (1, C, T)
    z_g = jnp.sum(g_exp, axis=1, keepdims=True)               # (1, 1, T)
    cross = jnp.sum(g_exp * p_shift, axis=1, keepdims=True)   # (1, 1, T)

    # Per spatial position:
    #   sum_c -softmax(g)_c * logsoftmax(p)_c
    #     = p_lse - (1/Z_g) * sum_c g_exp_c * p_shift_c
    # (uses sum_c softmax(g)_c == 1; avoids materializing softmax/log_softmax)
    row_loss = p_lse - cross * pl.reciprocal(z_g, approx=False)  # (1, 1, T)

    # Mask lanes past the true spatial extent (ragged last tile).  where()
    # selects, so garbage/NaN in the invalid lanes cannot leak through.
    lane = jax.lax.broadcasted_iota(jnp.int32, (1, 1, tile_lanes), 2)
    valid = ti * tile_lanes + lane < n_spatial
    acc_ref[...] += jnp.where(valid, row_loss, 0.0)

    @pl.when(ti == pl.num_programs(1) - 1)
    def _():
        # Single cross-lane reduce per batch element, broadcast into the
        # lane-dense (1, 1, 128) output block.
        out_ref[...] = jnp.full(out_ref.shape, jnp.sum(acc_ref[...]),
                                jnp.float32)


def distillation_loss(y_pred, y_gt, T=20, tile_lanes=8192):
    """y_pred, y_gt: (b, C, d, h, w) logits. Returns scalar float32 loss."""
    b, c, d, h, w = y_pred.shape
    assert y_gt.shape == y_pred.shape
    s = d * h * w
    denom = b * s

    # Free contiguous reshape: channel stays where it is (sublanes), the
    # flattened spatial dim becomes the lane axis.  No transpose, no padding,
    # no dtype pre-cast (bf16 inputs stay bf16 in HBM; the kernel upcasts).
    pred3d = y_pred.reshape(b, c, s)
    gt3d = y_gt.reshape(b, c, s)

    # Keep each input block <= ~4 MiB of raw bytes so 2 inputs x 2 pipeline
    # buffers fit comfortably in scoped VMEM on v5e/v6e/v7x.
    bytes_per_elem = jnp.dtype(y_pred.dtype).itemsize
    max_lanes = max(128, ((4 * 1024 * 1024) // (c * bytes_per_elem)) // 128 * 128)
    tl = min(int(tile_lanes), max_lanes, pl.cdiv(s, 128) * 128)
    nt = pl.cdiv(s, tl)

    kernel = functools.partial(_distill_kernel, inv_t=1.0 / float(T),
                               n_spatial=s, tile_lanes=tl)

    out = pl.pallas_call(
        kernel,
        out_shape=jax.ShapeDtypeStruct((b, 1, 128), jnp.float32),
        grid_spec=pltpu.PrefetchScalarGridSpec(
            num_scalar_prefetch=0,
            grid=(b, nt),
            in_specs=[
                pl.BlockSpec((1, c, tl), lambda bi, ti: (bi, 0, ti)),
                pl.BlockSpec((1, c, tl), lambda bi, ti: (bi, 0, ti)),
            ],
            out_specs=pl.BlockSpec((1, 1, 128), lambda bi, ti: (bi, 0, 0)),
            scratch_shapes=[pltpu.VMEM((1, 1, tl), jnp.float32)],
        ),
        compiler_params=pltpu.CompilerParams(
            dimension_semantics=("parallel", "arbitrary")),
    )(pred3d, gt3d)

    return jnp.sum(out[:, 0, 0]) * jnp.float32(1.0 / denom)


def distillation_loss_ref(y_pred, y_gt, T=20):
    b, c, d, h, w = y_pred.shape
    p = y_pred.astype(jnp.float32) / T
    g = y_gt.astype(jnp.float32) / T
    g_soft = jax.nn.softmax(g, axis=1)
    p_logsm = jax.nn.log_softmax(p, axis=1)
    return jnp.sum(-(g_soft * p_logsm)) / (b * d * h * w)


if __name__ == "__main__":
    key = jax.random.PRNGKey(0)

    # Case 1: nominal shape, spatial dim a clean multiple of 128 (single tile).
    k1, k2 = jax.random.split(key)
    b, c, d, h, w = 2, 4, 8, 16, 16
    y_pred = jax.random.normal(k1, (b, c, d, h, w), dtype=jnp.float32)
    y_gt = jax.random.normal(k2, (b, c, d, h, w), dtype=jnp.float32)

    f = jax.jit(distillation_loss, static_argnames=("T", "tile_lanes"))
    loss = f(y_pred, y_gt, T=20)
    jax.block_until_ready(loss)
    ref = distillation_loss_ref(y_pred, y_gt, T=20)
    assert jnp.allclose(loss, ref, rtol=1e-5, atol=1e-5), (loss, ref)

    # Case 2: ragged spatial extent + multiple tiles + batch of 1
    # (exercises the in-kernel lane mask and the accumulator carry).
    k3, k4 = jax.random.split(k1)
    b2, c2, d2, h2, w2 = 1, 5, 3, 7, 13   # S = 273 = 2*128 + 17
    y_pred2 = jax.random.normal(k3, (b2, c2, d2, h2, w2), dtype=jnp.float32)
    y_gt2 = jax.random.normal(k4, (b2, c2, d2, h2, w2), dtype=jnp.float32)
    loss2 = f(y_pred2, y_gt2, T=20, tile_lanes=128)
    jax.block_until_ready(loss2)
    ref2 = distillation_loss_ref(y_pred2, y_gt2, T=20)
    assert jnp.allclose(loss2, ref2, rtol=1e-5, atol=1e-5), (loss2, ref2)

    print("KERNEL_OK")
</pallas_src>

<mosaic_0001>
module attributes {stable_mosaic.version = 11 : i64} {
  func.func @_distill_kernel(%arg0: i32, %arg1: i32, %arg2: memref<1x4x2048xf32, #tpu.memory_space<vmem>>, %arg3: memref<1x4x2048xf32, #tpu.memory_space<vmem>>, %arg4: memref<1x1x128xf32, #tpu.memory_space<vmem>>, %arg5: memref<1x1x2048xf32, #tpu.memory_space<vmem>>) attributes {dimension_semantics = [#tpu.dimension_semantics<parallel>, #tpu.dimension_semantics<arbitrary>], iteration_bounds = array<i64: 2, 1>, scalar_prefetch = 0 : i64, scratch_operands = 1 : i64, tpu.core_type = #tpu.core_type<tc>, window_params = [{transform_indices = @transform_0, window_bounds = array<i64: 1, 4, 2048>}, {transform_indices = @transform_1, window_bounds = array<i64: 1, 4, 2048>}, {transform_indices = @transform_2, window_bounds = array<i64: 1, 1, 128>}]} {
    %c0_i32 = arith.constant 0 : i32
    %0 = arith.cmpi eq, %arg1, %c0_i32 : i32
    %1 = arith.extui %0 : i1 to i32
    %c0_i32_0 = arith.constant 0 : i32
    %2 = arith.cmpi ne, %1, %c0_i32_0 : i32
    scf.if %2 {
      %cst_22 = arith.constant 0.000000e+00 : f32
      %44 = vector.broadcast %cst_22 : f32 to vector<1x1x2048xf32>
      %c0_23 = arith.constant 0 : index
      %c0_24 = arith.constant 0 : index
      %c0_25 = arith.constant 0 : index
      %45 = vector.load %arg5[%c0_23, %c0_24, %c0_25] : memref<1x1x2048xf32, #tpu.memory_space<vmem>>, vector<1x1x2048xf32>
      tpu.vector_store %arg5[%c0_23, %c0_24, %c0_25], %44 {strides = array<i32>} : memref<1x1x2048xf32, #tpu.memory_space<vmem>>, vector<1x1x2048xf32>,
    } else {
    }
    %c0 = arith.constant 0 : index
    %c0_1 = arith.constant 0 : index
    %c0_2 = arith.constant 0 : index
    %3 = vector.load %arg2[%c0, %c0_1, %c0_2] : memref<1x4x2048xf32, #tpu.memory_space<vmem>>, vector<1x4x2048xf32>
    %cst = arith.constant 5.000000e-02 : f32
    %4 = vector.broadcast %cst : f32 to vector<1x4x2048xf32>
    %5 = arith.mulf %3, %4 : vector<1x4x2048xf32>
    %c0_3 = arith.constant 0 : index
    %c0_4 = arith.constant 0 : index
    %c0_5 = arith.constant 0 : index
    %6 = vector.load %arg3[%c0_3, %c0_4, %c0_5] : memref<1x4x2048xf32, #tpu.memory_space<vmem>>, vector<1x4x2048xf32>
    %cst_6 = arith.constant 5.000000e-02 : f32
    %7 = vector.broadcast %cst_6 : f32 to vector<1x4x2048xf32>
    %8 = arith.mulf %6, %7 : vector<1x4x2048xf32>
    %cst_7 = arith.constant dense<0xFF800000> : vector<1x2048xf32>
    %9 = vector.multi_reduction <maximumf>, %5, %cst_7 [1] : vector<1x4x2048xf32> to vector<1x2048xf32>
    %10 = vector.shape_cast %9 : vector<1x2048xf32> to vector<1x1x2048xf32>
    %11 = vector.broadcast %10 : vector<1x1x2048xf32> to vector<1x4x2048xf32>
    %12 = arith.subf %5, %11 : vector<1x4x2048xf32>
    %13 = math.exp %12 : vector<1x4x2048xf32>
    %cst_8 = arith.constant dense<0.000000e+00> : vector<1x2048xf32>
    %14 = vector.multi_reduction <add>, %13, %cst_8 [1] : vector<1x4x2048xf32> to vector<1x2048xf32>
    %15 = vector.shape_cast %14 : vector<1x2048xf32> to vector<1x1x2048xf32>
    %16 = math.log %15 : vector<1x1x2048xf32>
    %cst_9 = arith.constant dense<0xFF800000> : vector<1x2048xf32>
    %17 = vector.multi_reduction <maximumf>, %8, %cst_9 [1] : vector<1x4x2048xf32> to vector<1x2048xf32>
    %18 = vector.shape_cast %17 : vector<1x2048xf32> to vector<1x1x2048xf32>
    %19 = vector.broadcast %18 : vector<1x1x2048xf32> to vector<1x4x2048xf32>
    %20 = arith.subf %8, %19 : vector<1x4x2048xf32>
    %21 = math.exp %20 : vector<1x4x2048xf32>
    %cst_10 = arith.constant dense<0.000000e+00> : vector<1x2048xf32>
    %22 = vector.multi_reduction <add>, %21, %cst_10 [1] : vector<1x4x2048xf32> to vector<1x2048xf32>
    %23 = vector.shape_cast %22 : vector<1x2048xf32> to vector<1x1x2048xf32>
    %24 = arith.mulf %21, %12 : vector<1x4x2048xf32>
    %cst_11 = arith.constant dense<0.000000e+00> : vector<1x2048xf32>
    %25 = vector.multi_reduction <add>, %24, %cst_11 [1] : vector<1x4x2048xf32> to vector<1x2048xf32>
    %26 = vector.shape_cast %25 : vector<1x2048xf32> to vector<1x1x2048xf32>
    %27 = tpu.reciprocal %23 : vector<1x1x2048xf32> -> vector<1x1x2048xf32>
    %28 = arith.mulf %26, %27 : vector<1x1x2048xf32>
    %29 = arith.subf %16, %28 : vector<1x1x2048xf32>
    %30 = tpu.iota {dimensions = array<i32: 2>} : vector<1x1x2048xi32>
    %c2048_i32 = arith.constant 2048 : i32
    %31 = arith.muli %arg1, %c2048_i32 : i32
    %32 = vector.broadcast %31 : i32 to vector<1x1x2048xi32>
    %33 = arith.addi %32, %30 : vector<1x1x2048xi32>
    %c2048_i32_12 = arith.constant 2048 : i32
    %34 = vector.broadcast %c2048_i32_12 : i32 to vector<1x1x2048xi32>
    %35 = arith.cmpi slt, %33, %34 : vector<1x1x2048xi32>
    %c0_13 = arith.constant 0 : index
    %c0_14 = arith.constant 0 : index
    %c0_15 = arith.constant 0 : index
    %36 = vector.load %arg5[%c0_13, %c0_14, %c0_15] : memref<1x1x2048xf32, #tpu.memory_space<vmem>>, vector<1x1x2048xf32>
    %cst_16 = arith.constant 0.000000e+00 : f32
    %37 = vector.broadcast %cst_16 : f32 to vector<1x1x2048xf32>
    %38 = arith.select %35, %29, %37 : vector<1x1x2048xi1>, vector<1x1x2048xf32>
    %39 = arith.addf %36, %38 : vector<1x1x2048xf32>
    %c0_17 = arith.constant 0 : index
    %c0_18 = arith.constant 0 : index
    %c0_19 = arith.constant 0 : index
    %40 = vector.load %arg5[%c0_17, %c0_18, %c0_19] : memref<1x1x2048xf32, #tpu.memory_space<vmem>>, vector<1x1x2048xf32>
    tpu.vector_store %arg5[%c0_17, %c0_18, %c0_19], %39 {strides = array<i32>} : memref<1x1x2048xf32, #tpu.memory_space<vmem>>, vector<1x1x2048xf32>,
    %c0_i32_20 = arith.constant 0 : i32
    %41 = arith.cmpi eq, %arg1, %c0_i32_20 : i32
    %42 = arith.extui %41 : i1 to i32
    %c0_i32_21 = arith.constant 0 : i32
    %43 = arith.cmpi ne, %42, %c0_i32_21 : i32
    scf.if %43 {
      %c0_22 = arith.constant 0 : index
      %c0_23 = arith.constant 0 : index
      %c0_24 = arith.constant 0 : index
      %44 = vector.load %arg5[%c0_22, %c0_23, %c0_24] : memref<1x1x2048xf32, #tpu.memory_space<vmem>>, vector<1x1x2048xf32>
      %45 = vector.shape_cast %44 : vector<1x1x2048xf32> to vector<1x1x1x2048xf32>
      %cst_25 = arith.constant dense<0.000000e+00> : vector<1xf32>
      %46 = vector.multi_reduction <add>, %45, %cst_25 [1, 2, 3] : vector<1x1x1x2048xf32> to vector<1xf32>
      %47 = vector.shape_cast %46 : vector<1xf32> to vector<1x1x1x1xf32>
      %48 = vector.extract %47[0, 0, 0, 0] : f32 from vector<1x1x1x1xf32>
      %49 = vector.broadcast %48 : f32 to vector<1x1x128xf32>
      %c0_26 = arith.constant 0 : index
      %c0_27 = arith.constant 0 : index
      %c0_28 = arith.constant 0 : index
      %50 = vector.load %arg4[%c0_26, %c0_27, %c0_28] : memref<1x1x128xf32, #tpu.memory_space<vmem>>, vector<1x1x128xf32>
      tpu.vector_store %arg4[%c0_26, %c0_27, %c0_28], %49 {strides = array<i32>} : memref<1x1x128xf32, #tpu.memory_space<vmem>>, vector<1x1x128xf32>,
    } else {
    }
    return
  }
  func.func @transform_0(%arg0: i32, %arg1: i32) -> (i32, i32, i32) {
    %c0_i32 = arith.constant 0 : i32
    %c0_i32_0 = arith.constant 0 : i32
    return %arg0, %c0_i32, %arg1 : i32, i32, i32
  }
  func.func @transform_1(%arg0: i32, %arg1: i32) -> (i32, i32, i32) {
    %c0_i32 = arith.constant 0 : i32
    %c0_i32_0 = arith.constant 0 : i32
    return %arg0, %c0_i32, %arg1 : i32, i32, i32
  }
  func.func @transform_2(%arg0: i32, %arg1: i32) -> (i32, i32, i32) {
    %c0_i32 = arith.constant 0 : i32
    %c0_i32_0 = arith.constant 0 : i32
    %c0_i32_1 = arith.constant 0 : i32
    return %arg0, %c0_i32, %c0_i32_0 : i32, i32, i32
  }
}

</mosaic_0001>

<llo_original>
// kernel: distillation_loss.1
$region0: #{distillation_loss.1}
  #allocation0 [shape = 'u32[]', space=smem, size = 0x4, offset = 0x4, fixed_abs, tag = 'smem constant byte address 0x4 - core index']
  #allocation1 [shape = 'u32[72,128]{1,0:T(1,128)}', space=vmem, size = 0x9000, scoped, tag = 'internal scratch']
  #allocation2 [shape = 'f32[1,1,2048]{2,1,0:T(1,128)}', space=vmem, size = 0x2000, scoped, tag = 'scratch operand']
  %s0 = inlined_call_operand.vmem [shape: f32[2,4,2048], index: 0, kind: input, shape index: {}]
  %s1 = inlined_call_operand.vmem [shape: f32[2,4,2048], index: 1, kind: input, shape index: {}]
  %s2 = inlined_call_operand.vmem [shape: f32[2,1,128], index: 2, kind: output, shape index: {}]
  %s3 = sld [smem:[#allocation0]]
  $region49: #{distillation_loss.1} parent=0
    _
  %s5 = ssub.s32 1, %s3
  %s6 = scalar_select 0, %s5, %s3
  loop: start=0, step=1, limit=4
  $region2: #{distillation_loss.1} parent=0 // loop_pre_header
    _
  $region3: #{distillation_loss.1} parent=0 // loop_header
    %s8 = sphi 0, %s12
    %p9 = scmp.ge.s32.totalorder %s8, 4
    %s15 = sphi 0, %s27
    %s16 = sphi 0, %s23
    %s17 = sphi 0, %s15
    %s18 = sphi 0, %s16
    %s19 = sphi 0, %s17
    %s20 = sphi 0, %s18
    %s32 = sphi 0, %s34
    %s35 = sphi 0, %s32
    %s36 = sphi 0, %s35
    %s52 = sphi 0, %s36
    %s60 = sphi 0, %s62
    %s63 = sphi 0, %s60
    %s64 = sphi 0, %s63
    %s80 = sphi 0, %s64
    %s86 = sphi 0, %s88
    %s89 = sphi 0, %s86
    %s90 = sphi 0, %s89
    %s106 = sphi 0, %s90
  $region4: #{distillation_loss.1} parent=0 // loop_header_branch
    %11 = sbr.rel (%p9) target = $region8
  $region5: #{distillation_loss.1} parent=0 // loop_body
    %s13 = ssub.s32 %s8, 1
    %s14 = ssub.s32 %s8, 2
    %s21 = sadd.s32 1, %s16
    %p22 = scmp.ge.s32.totalorder %s21, 1
    %s23 = scalar_select %p22, 0, %s21
    %s24 = sadd.s32 1, %s15
    %s25 = scalar_select %p22, %s24, %s15
    %p26 = scmp.ge.s32.totalorder %s25, 2
    %s27 = scalar_select %p26, 0, %s25
    %s28 = ssub.s32 %s15, %s27
    %s29 = ssub.s32 %s16, %s23
    %s30 = sor.u32 %s28, %s29
    %p31 = scmp.eq.s32.totalorder %s30, 0
    %s33 = sadd.s32 %s32, 1
    %s34 = scalar_select %p31, %s32, %s33
    %p37 = pneg %p31
    %p38 = scmp.eq.s32.totalorder %s8, 1
    %p39 = por %p37, %p38
    %p40 = scmp.ne.s32.totalorder %s32, %s35
    %p41 = scmp.eq.s32.totalorder %s8, 0
    %p42 = por %p40, %p41
    %p43 = scmp.ne.s32.totalorder %s32, %s35
    %p44 = scmp.eq.s32.totalorder %s13, 1
    %p45 = por %p43, %p44
    %p46 = scmp.ne.s32.totalorder %s35, %s36
    %p47 = scmp.eq.s32.totalorder %s13, 0
    %p48 = por %p46, %p47
    %p49 = scmp.ne.s32.totalorder %s35, %s36
    %p50 = scmp.eq.s32.totalorder %s14, 1
    %p51 = por %p49, %p50
    %p53 = scmp.ne.s32.totalorder %s36, %s52
    %p54 = scmp.eq.s32.totalorder %s14, 0
    %p55 = por %p53, %p54
    %s56 = ssub.s32 %s15, %s27
    %s57 = ssub.s32 %s16, %s23
    %s58 = sor.u32 %s56, %s57
    %p59 = scmp.eq.s32.totalorder %s58, 0
    %s61 = sadd.s32 %s60, 1
    %s62 = scalar_select %p59, %s60, %s61
    %p65 = pneg %p59
    %p66 = scmp.eq.s32.totalorder %s8, 1
    %p67 = por %p65, %p66
    %p68 = scmp.ne.s32.totalorder %s60, %s63
    %p69 = scmp.eq.s32.totalorder %s8, 0
    %p70 = por %p68, %p69
    %p71 = scmp.ne.s32.totalorder %s60, %s63
    %p72 = scmp.eq.s32.totalorder %s13, 1
    %p73 = por %p71, %p72
    %p74 = scmp.ne.s32.totalorder %s63, %s64
    %p75 = scmp.eq.s32.totalorder %s13, 0
    %p76 = por %p74, %p75
    %p77 = scmp.ne.s32.totalorder %s63, %s64
    %p78 = scmp.eq.s32.totalorder %s14, 1
    %p79 = por %p77, %p78
    %p81 = scmp.ne.s32.totalorder %s64, %s80
    %p82 = scmp.eq.s32.totalorder %s14, 0
    %p83 = por %p81, %p82
    %s84 = ssub.s32 %s15, %s27
    %p85 = scmp.eq.s32.totalorder %s84, 0
    %s87 = sadd.s32 %s86, 1
    %s88 = scalar_select %p85, %s86, %s87
    %p91 = pneg %p85
    %p92 = scmp.eq.s32.totalorder %s8, 1
    %p93 = por %p91, %p92
    %p94 = scmp.ne.s32.totalorder %s86, %s89
    %p95 = scmp.eq.s32.totalorder %s8, 0
    %p96 = por %p94, %p95
    %p97 = scmp.ne.s32.totalorder %s86, %s89
    %p98 = scmp.eq.s32.totalorder %s13, 1
    %p99 = por %p97, %p98
    %p100 = scmp.ne.s32.totalorder %s89, %s90
    %p101 = scmp.eq.s32.totalorder %s13, 0
    %p102 = por %p100, %p101
    %p103 = scmp.ne.s32.totalorder %s89, %s90
    %p104 = scmp.eq.s32.totalorder %s14, 1
    %p105 = por %p103, %p104
    %p107 = scmp.ne.s32.totalorder %s90, %s106
    %p108 = scmp.eq.s32.totalorder %s14, 0
    %p109 = por %p107, %p108
    %p110 = scmp.le.s32.totalorder 1, %s8
    %p111 = scmp.lt.s32.totalorder %s8, 3
    %p112 = pnand %p110, %p111
    %p113 = pneg %p112
    // Predicated region
    $region9: #{distillation_loss.1} parent=5 // pred_check
      _
    $region10: #{distillation_loss.1} parent=5 // pred_check_branch
      %115 = sbr.rel (%p112) target = $region12
    $region11: #{distillation_loss.1} parent=5 // pred_region
      %s116 = ssub.s32 %s8, 1
    $region12: #{distillation_loss.1} parent=5 // pred_fallthru
      _
    %p117 = scmp.lt.s32.totalorder %s8, 2
    // Predicated region
    $region13: #{distillation_loss.1} parent=5 // pred_check
      %p118 = pneg %p117
    $region14: #{distillation_loss.1} parent=5 // pred_check_branch
      %120 = sbr.rel (%p118) target = $region16
    $region15: #{distillation_loss.1} parent=5 // pred_region
      // Predicated region
      $region17: #{distillation_loss.1} parent=15 // pred_check
        %p121 = pneg %p42
      $region18: #{distillation_loss.1} parent=15 // pred_check_branch
        %123 = sbr.rel (%p121) target = $region20
      $region19: #{distillation_loss.1} parent=15 // pred_region
        %s124 = smul.u32 16, %s16
        %p125 = scmp.lt.s32.totalorder %s15, 1
        %s126 = scalar_select %p125, %s15, 1
        %p127 = scmp.lt.s32.totalorder %s124, 15
        %s128 = scalar_select %p127, %s124, 15
        %s129 = smul.addr %s126, 16
        %s130 = sadd.s32 %s128, %s129
        %s131 = smul.addr %s130, 4
        %s132 = scalar_lea.vmem %s0, %s131
        %s133 = smul.u32 16, %s16
      $region20: #{distillation_loss.1} parent=15 // pred_fallthru
        _
      // Predicated region
      $region21: #{distillation_loss.1} parent=15 // pred_check
        %p134 = pneg %p70
      $region22: #{distillation_loss.1} parent=15 // pred_check_branch
        %136 = sbr.rel (%p134) target = $region24
      $region23: #{distillation_loss.1} parent=15 // pred_region
        %s137 = smul.u32 16, %s16
        %p138 = scmp.lt.s32.totalorder %s15, 1
        %s139 = scalar_select %p138, %s15, 1
        %p140 = scmp.lt.s32.totalorder %s137, 15
        %s141 = scalar_select %p140, %s137, 15
        %s142 = smul.addr %s139, 16
        %s143 = sadd.s32 %s141, %s142
        %s144 = smul.addr %s143, 4
        %s145 = scalar_lea.vmem %s1, %s144
        %s146 = smul.u32 16, %s16
      $region24: #{distillation_loss.1} parent=15 // pred_fallthru
        _
    $region16: #{distillation_loss.1} parent=5 // pred_fallthru
      _
    %p147 = scmp.le.s32.totalorder 1, %s8
    %p148 = scmp.lt.s32.totalorder %s8, 3
    %p149 = pnand %p147, %p148
    %p150 = pneg %p149
    // Predicated region
    $region25: #{distillation_loss.1} parent=5 // pred_check
      _
    $region26: #{distillation_loss.1} parent=5 // pred_check_branch
      %152 = sbr.rel (%p149) target = $region28
    $region27: #{distillation_loss.1} parent=5 // pred_region
      %s153 = ssub.s32 %s8, 1
      %s154 = smul.u32 16, %s18
      %p155 = scmp.lt.s32.totalorder %s17, 1
      %s156 = scalar_select %p155, %s17, 1
      %p157 = scmp.lt.s32.totalorder %s154, 15
      %s158 = scalar_select %p157, %s154, 15
      %s159 = smul.addr %s156, 16
      %s160 = sadd.s32 %s158, %s159
      %s161 = smul.addr %s160, 4
      %s162 = scalar_lea.vmem %s0, %s161
      %p163 = pneg %p48
      %p164 = pneg %p45
      %s165 = smul.u32 16, %s18
      %p166 = scmp.lt.s32.totalorder %s17, 1
      %s167 = scalar_select %p166, %s17, 1
      %p168 = scmp.lt.s32.totalorder %s165, 15
      %s169 = scalar_select %p168, %s165, 15
      %s170 = smul.addr %s167, 16
      %s171 = sadd.s32 %s169, %s170
      %s172 = smul.addr %s171, 4
      %s173 = scalar_lea.vmem %s1, %s172
      %p174 = pneg %p76
      %p175 = pneg %p73
      %p176 = pneg %p102
      %p177 = pneg %p99
      %p178 = scmp.lt.s32.totalorder %s17, 1
      %s179 = scalar_select %p178, %s17, 1
      %s180 = scalar_lea.vmem %s2, %s179
      %s181 = smul.u32 16, %s18
      %p182 = scmp.lt.s32.totalorder %s17, 1
      %s183 = scalar_select %p182, %s17, 1
      %p184 = scmp.lt.s32.totalorder %s181, 15
      %s185 = scalar_select %p184, %s181, 15
      %s186 = smul.addr %s183, 16
      %s187 = sadd.s32 %s185, %s186
      %s188 = smul.addr %s187, 4
      %s189 = scalar_lea.vmem %s0, %s188
      %s190 = smul.u32 16, %s18
      %s191 = smul.u32 16, %s18
      %p192 = scmp.lt.s32.totalorder %s17, 1
      %s193 = scalar_select %p192, %s17, 1
      %p194 = scmp.lt.s32.totalorder %s191, 15
      %s195 = scalar_select %p194, %s191, 15
      %s196 = smul.addr %s193, 16
      %s197 = sadd.s32 %s195, %s196
      %s198 = smul.addr %s197, 4
      %s199 = scalar_lea.vmem %s1, %s198
      %s200 = smul.u32 16, %s18
      %p201 = scmp.lt.s32.totalorder %s17, 1
      %s202 = scalar_select %p201, %s17, 1
      %s203 = scalar_lea.vmem %s2, %s202
      %p204 = scmp.eq.s32.totalorder %s18, 0
      // Predicated region
      $region29: #{distillation_loss.1} parent=27 // pred_check
        %p205 = pneg %p204
      $region30: #{distillation_loss.1} parent=27 // pred_check_branch
        %207 = sbr.rel (%p205) target = $region32
      $region31: #{distillation_loss.1} parent=27 // pred_region
        %208 = vst [vmem:[#allocation2] sm:$0xff] 0.0
        %209 = vst [vmem:[#allocation2 + $0x8] sm:$0xff] 0.0
      $region32: #{distillation_loss.1} parent=27 // pred_fallthru
        _
      %v210 = vld [vmem:[%s189] sm:$0xff]
      %v211 = vld [vmem:[%s189 + $0x8] sm:$0xff]
      %v212 = vld [vmem:[%s189 + $0x10] sm:$0xff]
      %v213 = vld [vmem:[%s189 + $0x18] sm:$0xff]
      %v214 = vld [vmem:[%s189 + $0x20] sm:$0xff]
      %v215 = vld [vmem:[%s189 + $0x28] sm:$0xff]
      %v216 = vld [vmem:[%s189 + $0x30] sm:$0xff]
      %v217 = vld [vmem:[%s189 + $0x38] sm:$0xff]
      %v218 = vmul.f32 %v210, 0.05
      %v219 = vmul.f32 %v211, 0.05
      %v220 = vmul.f32 %v212, 0.05
      %v221 = vmul.f32 %v213, 0.05
      %v222 = vmul.f32 %v214, 0.05
      %v223 = vmul.f32 %v215, 0.05
      %v224 = vmul.f32 %v216, 0.05
      %v225 = vmul.f32 %v217, 0.05
      %v226 = vld [vmem:[%s199] sm:$0xff]
      %v227 = vld [vmem:[%s199 + $0x8] sm:$0xff]
      %v228 = vld [vmem:[%s199 + $0x10] sm:$0xff]
      %v229 = vld [vmem:[%s199 + $0x18] sm:$0xff]
      %v230 = vld [vmem:[%s199 + $0x20] sm:$0xff]
      %v231 = vld [vmem:[%s199 + $0x28] sm:$0xff]
      %v232 = vld [vmem:[%s199 + $0x30] sm:$0xff]
      %v233 = vld [vmem:[%s199 + $0x38] sm:$0xff]
      %v234 = vmul.f32 %v226, 0.05
      %v235 = vmul.f32 %v227, 0.05
      %v236 = vmul.f32 %v228, 0.05
      %v237 = vmul.f32 %v229, 0.05
      %v238 = vmul.f32 %v230, 0.05
      %v239 = vmul.f32 %v231, 0.05
      %v240 = vmul.f32 %v232, 0.05
      %v241 = vmul.f32 %v233, 0.05
      %250 = vst [vmem:[#allocation1] ss:$2 sm:$0xff] %v218
      %s251 = scalar_lea.vmem [#allocation1], 16
      %252 = vst [vmem:[%s251] ss:$2 sm:$0xff] %v219
      %s253 = scalar_lea.vmem [#allocation1], 32
      %254 = vst [vmem:[%s253] ss:$2 sm:$0xff] %v220
      %s255 = scalar_lea.vmem [#allocation1], 48
      %256 = vst [vmem:[%s255] ss:$2 sm:$0xff] %v221
      %v257 = vld.sshfl [vmem:[#allocation1] sm:$0xff pattern:$0x75316420]
      %v258 = vld.sshfl [vmem:[#allocation1 + $0x8] sm:$0xff pattern:$0x75316420]
      %v259 = vld.sshfl [vmem:[#allocation1 + $0x10] sm:$0xff pattern:$0x75316420]
      %v260 = vld.sshfl [vmem:[#allocation1 + $0x18] sm:$0xff pattern:$0x75316420]
      %v261 = vld.sshfl [vmem:[#allocation1 + $0x20] sm:$0xff pattern:$0x75316420]
      %v262 = vld.sshfl [vmem:[#allocation1 + $0x28] sm:$0xff pattern:$0x75316420]
      %v263 = vld.sshfl [vmem:[#allocation1 + $0x30] sm:$0xff pattern:$0x75316420]
      %v264 = vld.sshfl [vmem:[#allocation1 + $0x38] sm:$0xff pattern:$0x75316420]
      %265 = vst [vmem:[#allocation1] ss:$2 sm:$0xff] %v222
      %266 = vst [vmem:[%s251] ss:$2 sm:$0xff] %v223
      %267 = vst [vmem:[%s253] ss:$2 sm:$0xff] %v224
      %268 = vst [vmem:[%s255] ss:$2 sm:$0xff] %v225
      %v269 = vld.sshfl [vmem:[#allocation1] sm:$0xff pattern:$0x75316420]
      %v270 = vld.sshfl [vmem:[#allocation1 + $0x8] sm:$0xff pattern:$0x75316420]
      %v271 = vld.sshfl [vmem:[#allocation1 + $0x10] sm:$0xff pattern:$0x75316420]
      %v272 = vld.sshfl [vmem:[#allocation1 + $0x18] sm:$0xff pattern:$0x75316420]
      %v273 = vld.sshfl [vmem:[#allocation1 + $0x20] sm:$0xff pattern:$0x75316420]
      %v274 = vld.sshfl [vmem:[#allocation1 + $0x28] sm:$0xff pattern:$0x75316420]
      %v275 = vld.sshfl [vmem:[#allocation1 + $0x30] sm:$0xff pattern:$0x75316420]
      %v276 = vld.sshfl [vmem:[#allocation1 + $0x38] sm:$0xff pattern:$0x75316420]
      %vm293 = vcmask 1043456
      %v294 = vsel %vm293, %v257, -inf
      %v295 = vrot.slane %v294, 4
      %v296 = vmax.f32 %v294, %v295
      %v297 = vrot.slane %v296, 2
      %v298 = vmax.f32 %v296, %v297
      %v299 = vrot.slane %v298, 1
      %v300 = vmax.f32 %v298, %v299
      %v301 = vsel %vm293, %v258, -inf
      %v302 = vrot.slane %v301, 4
      %v303 = vmax.f32 %v301, %v302
      %v304 = vrot.slane %v303, 2
      %v305 = vmax.f32 %v303, %v304
      %v306 = vrot.slane %v305, 1
      %v307 = vmax.f32 %v305, %v306
      %v308 = vsel %vm293, %v259, -inf
      %v309 = vrot.slane %v308, 4
      %v310 = vmax.f32 %v308, %v309
      %v311 = vrot.slane %v310, 2
      %v312 = vmax.f32 %v310, %v311
      %v313 = vrot.slane %v312, 1
      %v314 = vmax.f32 %v312, %v313
      %v315 = vsel %vm293, %v260, -inf
      %v316 = vrot.slane %v315, 4
      %v317 = vmax.f32 %v315, %v316
      %v318 = vrot.slane %v317, 2
      %v319 = vmax.f32 %v317, %v318
      %v320 = vrot.slane %v319, 1
      %v321 = vmax.f32 %v319, %v320
      %v322 = vsel %vm293, %v261, -inf
      %v323 = vrot.slane %v322, 4
      %v324 = vmax.f32 %v322, %v323
      %v325 = vrot.slane %v324, 2
      %v326 = vmax.f32 %v324, %v325
      %v327 = vrot.slane %v326, 1
      %v328 = vmax.f32 %v326, %v327
      %v329 = vsel %vm293, %v262, -inf
      %v330 = vrot.slane %v329, 4
      %v331 = vmax.f32 %v329, %v330
      %v332 = vrot.slane %v331, 2
      %v333 = vmax.f32 %v331, %v332
      %v334 = vrot.slane %v333, 1
      %v335 = vmax.f32 %v333, %v334
      %v336 = vsel %vm293, %v263, -inf
      %v337 = vrot.slane %v336, 4
      %v338 = vmax.f32 %v336, %v337
      %v339 = vrot.slane %v338, 2
      %v340 = vmax.f32 %v338, %v339
      %v341 = vrot.slane %v340, 1
      %v342 = vmax.f32 %v340, %v341
      %v343 = vsel %vm293, %v264, -inf
      %v344 = vrot.slane %v343, 4
      %v345 = vmax.f32 %v343, %v344
      %v346 = vrot.slane %v345, 2
      %v347 = vmax.f32 %v345, %v346
      %v348 = vrot.slane %v347, 1
      %v349 = vmax.f32 %v347, %v348
      %v350 = vsel %vm293, %v269, -inf
      %v351 = vrot.slane %v350, 4
      %v352 = vmax.f32 %v350, %v351
      %v353 = vrot.slane %v352, 2
      %v354 = vmax.f32 %v352, %v353
      %v355 = vrot.slane %v354, 1
      %v356 = vmax.f32 %v354, %v355
      %v357 = vsel %vm293, %v270, -inf
      %v358 = vrot.slane %v357, 4
      %v359 = vmax.f32 %v357, %v358
      %v360 = vrot.slane %v359, 2
      %v361 = vmax.f32 %v359, %v360
      %v362 = vrot.slane %v361, 1
      %v363 = vmax.f32 %v361, %v362
      %v364 = vsel %vm293, %v271, -inf
      %v365 = vrot.slane %v364, 4
      %v366 = vmax.f32 %v364, %v365
      %v367 = vrot.slane %v366, 2
      %v368 = vmax.f32 %v366, %v367
      %v369 = vrot.slane %v368, 1
      %v370 = vmax.f32 %v368, %v369
      %v371 = vsel %vm293, %v272, -inf
      %v372 = vrot.slane %v371, 4
      %v373 = vmax.f32 %v371, %v372
      %v374 = vrot.slane %v373, 2
      %v375 = vmax.f32 %v373, %v374
      %v376 = vrot.slane %v375, 1
      %v377 = vmax.f32 %v375, %v376
      %v378 = vsel %vm293, %v273, -inf
      %v379 = vrot.slane %v378, 4
      %v380 = vmax.f32 %v378, %v379
      %v381 = vrot.slane %v380, 2
      %v382 = vmax.f32 %v380, %v381
      %v383 = vrot.slane %v382, 1
      %v384 = vmax.f32 %v382, %v383
      %v385 = vsel %vm293, %v274, -inf
      %v386 = vrot.slane %v385, 4
      %v387 = vmax.f32 %v385, %v386
      %v388 = vrot.slane %v387, 2
      %v389 = vmax.f32 %v387, %v388
      %v390 = vrot.slane %v389, 1
      %v391 = vmax.f32 %v389, %v390
      %v392 = vsel %vm293, %v275, -inf
      %v393 = vrot.slane %v392, 4
      %v394 = vmax.f32 %v392, %v393
      %v395 = vrot.slane %v394, 2
      %v396 = vmax.f32 %v394, %v395
      %v397 = vrot.slane %v396, 1
      %v398 = vmax.f32 %v396, %v397
      %v399 = vsel %vm293, %v276, -inf
      %v400 = vrot.slane %v399, 4
      %v401 = vmax.f32 %v399, %v400
      %v402 = vrot.slane %v401, 2
      %v403 = vmax.f32 %v401, %v402
      %v404 = vrot.slane %v403, 1
      %v405 = vmax.f32 %v403, %v404
      %v422 = vrot.slane %v307, 4
      %v423 = vrot.slane %v321, 4
      %v424 = vrot.slane %v335, 4
      %v425 = vrot.slane %v349, 4
      %v426 = vrot.slane %v363, 4
      %v427 = vrot.slane %v377, 4
      %v428 = vrot.slane %v391, 4
      %v429 = vrot.slane %v405, 4
      %v430 = vsel %vm293, %v300, %v422
      %v431 = vsel %vm293, %v314, %v423
      %v432 = vsel %vm293, %v328, %v424
      %v433 = vsel %vm293, %v342, %v425
      %v434 = vsel %vm293, %v356, %v426
      %v435 = vsel %vm293, %v370, %v427
      %v436 = vsel %vm293, %v384, %v428
      %v437 = vsel %vm293, %v398, %v429
      %v446 = vsub.f32 %v218, %v430
      %v447 = vsub.f32 %v219, %v431
      %v448 = vsub.f32 %v220, %v432
      %v449 = vsub.f32 %v221, %v433
      %v450 = vsub.f32 %v222, %v434
      %v451 = vsub.f32 %v223, %v435
      %v452 = vsub.f32 %v224, %v436
      %v453 = vsub.f32 %v225, %v437
      %v454 = vmul.f32 %v446, 1.442695
      %v455 = vpow.pop %v454
      %v456 = vmul.f32 %v447, 1.442695
      %v457 = vpow.pop %v456
      %v458 = vmul.f32 %v448, 1.442695
      %v459 = vpow.pop %v458
      %v460 = vmul.f32 %v449, 1.442695
      %v461 = vpow.pop %v460
      %v462 = vmul.f32 %v450, 1.442695
      %v463 = vpow.pop %v462
      %v464 = vmul.f32 %v451, 1.442695
      %v465 = vpow.pop %v464
      %v466 = vmul.f32 %v452, 1.442695
      %v467 = vpow.pop %v466
      %v468 = vmul.f32 %v453, 1.442695
      %v469 = vpow.pop %v468
      %478 = vst [vmem:[#allocation1] ss:$2 sm:$0xff] %v455
      %s479 = scalar_lea.vmem [#allocation1], 16
      %480 = vst [vmem:[%s479] ss:$2 sm:$0xff] %v457
      %s481 = scalar_lea.vmem [#allocation1], 32
      %482 = vst [vmem:[%s481] ss:$2 sm:$0xff] %v459
      %s483 = scalar_lea.vmem [#allocation1], 48
      %484 = vst [vmem:[%s483] ss:$2 sm:$0xff] %v461
      %v485 = vld.sshfl [vmem:[#allocation1] sm:$0xff pattern:$0x75316420]
      %v486 = vld.sshfl [vmem:[#allocation1 + $0x8] sm:$0xff pattern:$0x75316420]
      %v487 = vld.sshfl [vmem:[#allocation1 + $0x10] sm:$0xff pattern:$0x75316420]
      %v488 = vld.sshfl [vmem:[#allocation1 + $0x18] sm:$0xff pattern:$0x75316420]
      %v489 = vld.sshfl [vmem:[#allocation1 + $0x20] sm:$0xff pattern:$0x75316420]
      %v490 = vld.sshfl [vmem:[#allocation1 + $0x28] sm:$0xff pattern:$0x75316420]
      %v491 = vld.sshfl [vmem:[#allocation1 + $0x30] sm:$0xff pattern:$0x75316420]
      %v492 = vld.sshfl [vmem:[#allocation1 + $0x38] sm:$0xff pattern:$0x75316420]
      %493 = vst [vmem:[#allocation1] ss:$2 sm:$0xff] %v463
      %494 = vst [vmem:[%s479] ss:$2 sm:$0xff] %v465
      %495 = vst [vmem:[%s481] ss:$2 sm:$0xff] %v467
      %496 = vst [vmem:[%s483] ss:$2 sm:$0xff] %v469
      %v497 = vld.sshfl [vmem:[#allocation1] sm:$0xff pattern:$0x75316420]
      %v498 = vld.sshfl [vmem:[#allocation1 + $0x8] sm:$0xff pattern:$0x75316420]
      %v499 = vld.sshfl [vmem:[#allocation1 + $0x10] sm:$0xff pattern:$0x75316420]
      %v500 = vld.sshfl [vmem:[#allocation1 + $0x18] sm:$0xff pattern:$0x75316420]
      %v501 = vld.sshfl [vmem:[#allocation1 + $0x20] sm:$0xff pattern:$0x75316420]
      %v502 = vld.sshfl [vmem:[#allocation1 + $0x28] sm:$0xff pattern:$0x75316420]
      %v503 = vld.sshfl [vmem:[#allocation1 + $0x30] sm:$0xff pattern:$0x75316420]
      %v504 = vld.sshfl [vmem:[#allocation1 + $0x38] sm:$0xff pattern:$0x75316420]
      %v521 = vsel %vm293, %v485, 0.0
      %v522 = vrot.slane %v521, 4
      %v523 = vadd.f32 %v521, %v522
      %v524 = vrot.slane %v523, 2
      %v525 = vadd.f32 %v523, %v524
      %v526 = vrot.slane %v525, 1
      %v527 = vadd.f32 %v525, %v526
      %v528 = vsel %vm293, %v486, 0.0
      %v529 = vrot.slane %v528, 4
      %v530 = vadd.f32 %v528, %v529
      %v531 = vrot.slane %v530, 2
      %v532 = vadd.f32 %v530, %v531
      %v533 = vrot.slane %v532, 1
      %v534 = vadd.f32 %v532, %v533
      %v535 = vsel %vm293, %v487, 0.0
      %v536 = vrot.slane %v535, 4
      %v537 = vadd.f32 %v535, %v536
      %v538 = vrot.slane %v537, 2
      %v539 = vadd.f32 %v537, %v538
      %v540 = vrot.slane %v539, 1
      %v541 = vadd.f32 %v539, %v540
      %v542 = vsel %vm293, %v488, 0.0
      %v543 = vrot.slane %v542, 4
      %v544 = vadd.f32 %v542, %v543
      %v545 = vrot.slane %v544, 2
      %v546 = vadd.f32 %v544, %v545
      %v547 = vrot.slane %v546, 1
      %v548 = vadd.f32 %v546, %v547
      %v549 = vsel %vm293, %v489, 0.0
      %v550 = vrot.slane %v549, 4
      %v551 = vadd.f32 %v549, %v550
      %v552 = vrot.slane %v551, 2
      %v553 = vadd.f32 %v551, %v552
      %v554 = vrot.slane %v553, 1
      %v555 = vadd.f32 %v553, %v554
      %v556 = vsel %vm293, %v490, 0.0
      %v557 = vrot.slane %v556, 4
      %v558 = vadd.f32 %v556, %v557
      %v559 = vrot.slane %v558, 2
      %v560 = vadd.f32 %v558, %v559
      %v561 = vrot.slane %v560, 1
      %v562 = vadd.f32 %v560, %v561
      %v563 = vsel %vm293, %v491, 0.0
      %v564 = vrot.slane %v563, 4
      %v565 = vadd.f32 %v563, %v564
      %v566 = vrot.slane %v565, 2
      %v567 = vadd.f32 %v565, %v566
      %v568 = vrot.slane %v567, 1
      %v569 = vadd.f32 %v567, %v568
      %v570 = vsel %vm293, %v492, 0.0
      %v571 = vrot.slane %v570, 4
      %v572 = vadd.f32 %v570, %v571
      %v573 = vrot.slane %v572, 2
      %v574 = vadd.f32 %v572, %v573
      %v575 = vrot.slane %v574, 1
      %v576 = vadd.f32 %v574, %v575
      %v577 = vsel %vm293, %v497, 0.0
      %v578 = vrot.slane %v577, 4
      %v579 = vadd.f32 %v577, %v578
      %v580 = vrot.slane %v579, 2
      %v581 = vadd.f32 %v579, %v580
      %v582 = vrot.slane %v581, 1
      %v583 = vadd.f32 %v581, %v582
      %v584 = vsel %vm293, %v498, 0.0
      %v585 = vrot.slane %v584, 4
      %v586 = vadd.f32 %v584, %v585
      %v587 = vrot.slane %v586, 2
      %v588 = vadd.f32 %v586, %v587
      %v589 = vrot.slane %v588, 1
      %v590 = vadd.f32 %v588, %v589
      %v591 = vsel %vm293, %v499, 0.0
      %v592 = vrot.slane %v591, 4
      %v593 = vadd.f32 %v591, %v592
      %v594 = vrot.slane %v593, 2
      %v595 = vadd.f32 %v593, %v594
      %v596 = vrot.slane %v595, 1
      %v597 = vadd.f32 %v595, %v596
      %v598 = vsel %vm293, %v500, 0.0
      %v599 = vrot.slane %v598, 4
      %v600 = vadd.f32 %v598, %v599
      %v601 = vrot.slane %v600, 2
      %v602 = vadd.f32 %v600, %v601
      %v603 = vrot.slane %v602, 1
      %v604 = vadd.f32 %v602, %v603
      %v605 = vsel %vm293, %v501, 0.0
      %v606 = vrot.slane %v605, 4
      %v607 = vadd.f32 %v605, %v606
      %v608 = vrot.slane %v607, 2
      %v609 = vadd.f32 %v607, %v608
      %v610 = vrot.slane %v609, 1
      %v611 = vadd.f32 %v609, %v610
      %v612 = vsel %vm293, %v502, 0.0
      %v613 = vrot.slane %v612, 4
      %v614 = vadd.f32 %v612, %v613
      %v615 = vrot.slane %v614, 2
      %v616 = vadd.f32 %v614, %v615
      %v617 = vrot.slane %v616, 1
      %v618 = vadd.f32 %v616, %v617
      %v619 = vsel %vm293, %v503, 0.0
      %v620 = vrot.slane %v619, 4
      %v621 = vadd.f32 %v619, %v620
      %v622 = vrot.slane %v621, 2
      %v623 = vadd.f32 %v621, %v622
      %v624 = vrot.slane %v623, 1
      %v625 = vadd.f32 %v623, %v624
      %v626 = vsel %vm293, %v504, 0.0
      %v627 = vrot.slane %v626, 4
      %v628 = vadd.f32 %v626, %v627
      %v629 = vrot.slane %v628, 2
      %v630 = vadd.f32 %v628, %v629
      %v631 = vrot.slane %v630, 1
      %v632 = vadd.f32 %v630, %v631
      %v633 = vlog2.pop %v527
      %v634 = vmul.f32 %v633, 0.6931472
      %v635 = vlog2.pop %v534
      %v636 = vmul.f32 %v635, 0.6931472
      %v637 = vlog2.pop %v541
      %v638 = vmul.f32 %v637, 0.6931472
      %v639 = vlog2.pop %v548
      %v640 = vmul.f32 %v639, 0.6931472
      %v641 = vlog2.pop %v555
      %v642 = vmul.f32 %v641, 0.6931472
      %v643 = vlog2.pop %v562
      %v644 = vmul.f32 %v643, 0.6931472
      %v645 = vlog2.pop %v569
      %v646 = vmul.f32 %v645, 0.6931472
      %v647 = vlog2.pop %v576
      %v648 = vmul.f32 %v647, 0.6931472
      %v649 = vlog2.pop %v583
      %v650 = vmul.f32 %v649, 0.6931472
      %v651 = vlog2.pop %v590
      %v652 = vmul.f32 %v651, 0.6931472
      %v653 = vlog2.pop %v597
      %v654 = vmul.f32 %v653, 0.6931472
      %v655 = vlog2.pop %v604
      %v656 = vmul.f32 %v655, 0.6931472
      %v657 = vlog2.pop %v611
      %v658 = vmul.f32 %v657, 0.6931472
      %v659 = vlog2.pop %v618
      %v660 = vmul.f32 %v659, 0.6931472
      %v661 = vlog2.pop %v625
      %v662 = vmul.f32 %v661, 0.6931472
      %v663 = vlog2.pop %v632
      %v664 = vmul.f32 %v663, 0.6931472
      %673 = vst [vmem:[#allocation1] ss:$2 sm:$0xff] %v234
      %s674 = scalar_lea.vmem [#allocation1], 16
      %675 = vst [vmem:[%s674] ss:$2 sm:$0xff] %v235
      %s676 = scalar_lea.vmem [#allocation1], 32
      %677 = vst [vmem:[%s676] ss:$2 sm:$0xff] %v236
      %s678 = scalar_lea.vmem [#allocation1], 48
      %679 = vst [vmem:[%s678] ss:$2 sm:$0xff] %v237
      %v680 = vld.sshfl [vmem:[#allocation1] sm:$0xff pattern:$0x75316420]
      %v681 = vld.sshfl [vmem:[#allocation1 + $0x8] sm:$0xff pattern:$0x75316420]
      %v682 = vld.sshfl [vmem:[#allocation1 + $0x10] sm:$0xff pattern:$0x75316420]
      %v683 = vld.sshfl [vmem:[#allocation1 + $0x18] sm:$0xff pattern:$0x75316420]
      %v684 = vld.sshfl [vmem:[#allocation1 + $0x20] sm:$0xff pattern:$0x75316420]
      %v685 = vld.sshfl [vmem:[#allocation1 + $0x28] sm:$0xff pattern:$0x75316420]
      %v686 = vld.sshfl [vmem:[#allocation1 + $0x30] sm:$0xff pattern:$0x75316420]
      %v687 = vld.sshfl [vmem:[#allocation1 + $0x38] sm:$0xff pattern:$0x75316420]
      %688 = vst [vmem:[#allocation1] ss:$2 sm:$0xff] %v238
      %689 = vst [vmem:[%s674] ss:$2 sm:$0xff] %v239
      %690 = vst [vmem:[%s676] ss:$2 sm:$0xff] %v240
      %691 = vst [vmem:[%s678] ss:$2 sm:$0xff] %v241
      %v692 = vld.sshfl [vmem:[#allocation1] sm:$0xff pattern:$0x75316420]
      %v693 = vld.sshfl [vmem:[#allocation1 + $0x8] sm:$0xff pattern:$0x75316420]
      %v694 = vld.sshfl [vmem:[#allocation1 + $0x10] sm:$0xff pattern:$0x75316420]
      %v695 = vld.sshfl [vmem:[#allocation1 + $0x18] sm:$0xff pattern:$0x75316420]
      %v696 = vld.sshfl [vmem:[#allocation1 + $0x20] sm:$0xff pattern:$0x75316420]
      %v697 = vld.sshfl [vmem:[#allocation1 + $0x28] sm:$0xff pattern:$0x75316420]
      %v698 = vld.sshfl [vmem:[#allocation1 + $0x30] sm:$0xff pattern:$0x75316420]
      %v699 = vld.sshfl [vmem:[#allocation1 + $0x38] sm:$0xff pattern:$0x75316420]
      %v716 = vsel %vm293, %v680, -inf
      %v717 = vrot.slane %v716, 4
      %v718 = vmax.f32 %v716, %v717
      %v719 = vrot.slane %v718, 2
      %v720 = vmax.f32 %v718, %v719
      %v721 = vrot.slane %v720, 1
      %v722 = vmax.f32 %v720, %v721
      %v723 = vsel %vm293, %v681, -inf
      %v724 = vrot.slane %v723, 4
      %v725 = vmax.f32 %v723, %v724
      %v726 = vrot.slane %v725, 2
      %v727 = vmax.f32 %v725, %v726
      %v728 = vrot.slane %v727, 1
      %v729 = vmax.f32 %v727, %v728
      %v730 = vsel %vm293, %v682, -inf
      %v731 = vrot.slane %v730, 4
      %v732 = vmax.f32 %v730, %v731
      %v733 = vrot.slane %v732, 2
      %v734 = vmax.f32 %v732, %v733
      %v735 = vrot.slane %v734, 1
      %v736 = vmax.f32 %v734, %v735
      %v737 = vsel %vm293, %v683, -inf
      %v738 = vrot.slane %v737, 4
      %v739 = vmax.f32 %v737, %v738
      %v740 = vrot.slane %v739, 2
      %v741 = vmax.f32 %v739, %v740
      %v742 = vrot.slane %v741, 1
      %v743 = vmax.f32 %v741, %v742
      %v744 = vsel %vm293, %v684, -inf
      %v745 = vrot.slane %v744, 4
      %v746 = vmax.f32 %v744, %v745
      %v747 = vrot.slane %v746, 2
      %v748 = vmax.f32 %v746, %v747
      %v749 = vrot.slane %v748, 1
      %v750 = vmax.f32 %v748, %v749
      %v751 = vsel %vm293, %v685, -inf
      %v752 = vrot.slane %v751, 4
      %v753 = vmax.f32 %v751, %v752
      %v754 = vrot.slane %v753, 2
      %v755 = vmax.f32 %v753, %v754
      %v756 = vrot.slane %v755, 1
      %v757 = vmax.f32 %v755, %v756
      %v758 = vsel %vm293, %v686, -inf
      %v759 = vrot.slane %v758, 4
      %v760 = vmax.f32 %v758, %v759
      %v761 = vrot.slane %v760, 2
      %v762 = vmax.f32 %v760, %v761
      %v763 = vrot.slane %v762, 1
      %v764 = vmax.f32 %v762, %v763
      %v765 = vsel %vm293, %v687, -inf
      %v766 = vrot.slane %v765, 4
      %v767 = vmax.f32 %v765, %v766
      %v768 = vrot.slane %v767, 2
      %v769 = vmax.f32 %v767, %v768
      %v770 = vrot.slane %v769, 1
      %v771 = vmax.f32 %v769, %v770
      %v772 = vsel %vm293, %v692, -inf
      %v773 = vrot.slane %v772, 4
      %v774 = vmax.f32 %v772, %v773
      %v775 = vrot.slane %v774, 2
      %v776 = vmax.f32 %v774, %v775
      %v777 = vrot.slane %v776, 1
      %v778 = vmax.f32 %v776, %v777
      %v779 = vsel %vm293, %v693, -inf
      %v780 = vrot.slane %v779, 4
      %v781 = vmax.f32 %v779, %v780
      %v782 = vrot.slane %v781, 2
      %v783 = vmax.f32 %v781, %v782
      %v784 = vrot.slane %v783, 1
      %v785 = vmax.f32 %v783, %v784
      %v786 = vsel %vm293, %v694, -inf
      %v787 = vrot.slane %v786, 4
      %v788 = vmax.f32 %v786, %v787
      %v789 = vrot.slane %v788, 2
      %v790 = vmax.f32 %v788, %v789
      %v791 = vrot.slane %v790, 1
      %v792 = vmax.f32 %v790, %v791
      %v793 = vsel %vm293, %v695, -inf
      %v794 = vrot.slane %v793, 4
      %v795 = vmax.f32 %v793, %v794
      %v796 = vrot.slane %v795, 2
      %v797 = vmax.f32 %v795, %v796
      %v798 = vrot.slane %v797, 1
      %v799 = vmax.f32 %v797, %v798
      %v800 = vsel %vm293, %v696, -inf
      %v801 = vrot.slane %v800, 4
      %v802 = vmax.f32 %v800, %v801
      %v803 = vrot.slane %v802, 2
      %v804 = vmax.f32 %v802, %v803
      %v805 = vrot.slane %v804, 1
      %v806 = vmax.f32 %v804, %v805
      %v807 = vsel %vm293, %v697, -inf
      %v808 = vrot.slane %v807, 4
      %v809 = vmax.f32 %v807, %v808
      %v810 = vrot.slane %v809, 2
      %v811 = vmax.f32 %v809, %v810
      %v812 = vrot.slane %v811, 1
      %v813 = vmax.f32 %v811, %v812
      %v814 = vsel %vm293, %v698, -inf
      %v815 = vrot.slane %v814, 4
      %v816 = vmax.f32 %v814, %v815
      %v817 = vrot.slane %v816, 2
      %v818 = vmax.f32 %v816, %v817
      %v819 = vrot.slane %v818, 1
      %v820 = vmax.f32 %v818, %v819
      %v821 = vsel %vm293, %v699, -inf
      %v822 = vrot.slane %v821, 4
      %v823 = vmax.f32 %v821, %v822
      %v824 = vrot.slane %v823, 2
      %v825 = vmax.f32 %v823, %v824
      %v826 = vrot.slane %v825, 1
      %v827 = vmax.f32 %v825, %v826
      %v844 = vrot.slane %v729, 4
      %v845 = vrot.slane %v743, 4
      %v846 = vrot.slane %v757, 4
      %v847 = vrot.slane %v771, 4
      %v848 = vrot.slane %v785, 4
      %v849 = vrot.slane %v799, 4
      %v850 = vrot.slane %v813, 4
      %v851 = vrot.slane %v827, 4
      %v852 = vsel %vm293, %v722, %v844
      %v853 = vsel %vm293, %v736, %v845
      %v854 = vsel %vm293, %v750, %v846
      %v855 = vsel %vm293, %v764, %v847
      %v856 = vsel %vm293, %v778, %v848
      %v857 = vsel %vm293, %v792, %v849
      %v858 = vsel %vm293, %v806, %v850
      %v859 = vsel %vm293, %v820, %v851
      %v868 = vsub.f32 %v234, %v852
      %v869 = vsub.f32 %v235, %v853
      %v870 = vsub.f32 %v236, %v854
      %v871 = vsub.f32 %v237, %v855
      %v872 = vsub.f32 %v238, %v856
      %v873 = vsub.f32 %v239, %v857
      %v874 = vsub.f32 %v240, %v858
      %v875 = vsub.f32 %v241, %v859
      %v876 = vmul.f32 %v868, 1.442695
      %v877 = vpow.pop %v876
      %v878 = vmul.f32 %v869, 1.442695
      %v879 = vpow.pop %v878
      %v880 = vmul.f32 %v870, 1.442695
      %v881 = vpow.pop %v880
      %v882 = vmul.f32 %v871, 1.442695
      %v883 = vpow.pop %v882
      %v884 = vmul.f32 %v872, 1.442695
      %v885 = vpow.pop %v884
      %v886 = vmul.f32 %v873, 1.442695
      %v887 = vpow.pop %v886
      %v888 = vmul.f32 %v874, 1.442695
      %v889 = vpow.pop %v888
      %v890 = vmul.f32 %v875, 1.442695
      %v891 = vpow.pop %v890
      %900 = vst [vmem:[#allocation1] ss:$2 sm:$0xff] %v877
      %s901 = scalar_lea.vmem [#allocation1], 16
      %902 = vst [vmem:[%s901] ss:$2 sm:$0xff] %v879
      %s903 = scalar_lea.vmem [#allocation1], 32
      %904 = vst [vmem:[%s903] ss:$2 sm:$0xff] %v881
      %s905 = scalar_lea.vmem [#allocation1], 48
      %906 = vst [vmem:[%s905] ss:$2 sm:$0xff] %v883
      %v907 = vld.sshfl [vmem:[#allocation1] sm:$0xff pattern:$0x75316420]
      %v908 = vld.sshfl [vmem:[#allocation1 + $0x8] sm:$0xff pattern:$0x75316420]
      %v909 = vld.sshfl [vmem:[#allocation1 + $0x10] sm:$0xff pattern:$0x75316420]
      %v910 = vld.sshfl [vmem:[#allocation1 + $0x18] sm:$0xff pattern:$0x75316420]
      %v911 = vld.sshfl [vmem:[#allocation1 + $0x20] sm:$0xff pattern:$0x75316420]
      %v912 = vld.sshfl [vmem:[#allocation1 + $0x28] sm:$0xff pattern:$0x75316420]
      %v913 = vld.sshfl [vmem:[#allocation1 + $0x30] sm:$0xff pattern:$0x75316420]
      %v914 = vld.sshfl [vmem:[#allocation1 + $0x38] sm:$0xff pattern:$0x75316420]
      %915 = vst [vmem:[#allocation1] ss:$2 sm:$0xff] %v885
      %916 = vst [vmem:[%s901] ss:$2 sm:$0xff] %v887
      %917 = vst [vmem:[%s903] ss:$2 sm:$0xff] %v889
      %918 = vst [vmem:[%s905] ss:$2 sm:$0xff] %v891
      %v919 = vld.sshfl [vmem:[#allocation1] sm:$0xff pattern:$0x75316420]
      %v920 = vld.sshfl [vmem:[#allocation1 + $0x8] sm:$0xff pattern:$0x75316420]
      %v921 = vld.sshfl [vmem:[#allocation1 + $0x10] sm:$0xff pattern:$0x75316420]
      %v922 = vld.sshfl [vmem:[#allocation1 + $0x18] sm:$0xff pattern:$0x75316420]
      %v923 = vld.sshfl [vmem:[#allocation1 + $0x20] sm:$0xff pattern:$0x75316420]
      %v924 = vld.sshfl [vmem:[#allocation1 + $0x28] sm:$0xff pattern:$0x75316420]
      %v925 = vld.sshfl [vmem:[#allocation1 + $0x30] sm:$0xff pattern:$0x75316420]
      %v926 = vld.sshfl [vmem:[#allocation1 + $0x38] sm:$0xff pattern:$0x75316420]
      %v943 = vsel %vm293, %v907, 0.0
      %v944 = vrot.slane %v943, 4
      %v945 = vadd.f32 %v943, %v944
      %v946 = vrot.slane %v945, 2
      %v947 = vadd.f32 %v945, %v946
      %v948 = vrot.slane %v947, 1
      %v949 = vadd.f32 %v947, %v948
      %v950 = vsel %vm293, %v908, 0.0
      %v951 = vrot.slane %v950, 4
      %v952 = vadd.f32 %v950, %v951
      %v953 = vrot.slane %v952, 2
      %v954 = vadd.f32 %v952, %v953
      %v955 = vrot.slane %v954, 1
      %v956 = vadd.f32 %v954, %v955
      %v957 = vsel %vm293, %v909, 0.0
      %v958 = vrot.slane %v957, 4
      %v959 = vadd.f32 %v957, %v958
      %v960 = vrot.slane %v959, 2
      %v961 = vadd.f32 %v959, %v960
      %v962 = vrot.slane %v961, 1
      %v963 = vadd.f32 %v961, %v962
      %v964 = vsel %vm293, %v910, 0.0
      %v965 = vrot.slane %v964, 4
      %v966 = vadd.f32 %v964, %v965
      %v967 = vrot.slane %v966, 2
      %v968 = vadd.f32 %v966, %v967
      %v969 = vrot.slane %v968, 1
      %v970 = vadd.f32 %v968, %v969
      %v971 = vsel %vm293, %v911, 0.0
      %v972 = vrot.slane %v971, 4
      %v973 = vadd.f32 %v971, %v972
      %v974 = vrot.slane %v973, 2
      %v975 = vadd.f32 %v973, %v974
      %v976 = vrot.slane %v975, 1
      %v977 = vadd.f32 %v975, %v976
      %v978 = vsel %vm293, %v912, 0.0
      %v979 = vrot.slane %v978, 4
      %v980 = vadd.f32 %v978, %v979
      %v981 = vrot.slane %v980, 2
      %v982 = vadd.f32 %v980, %v981
      %v983 = vrot.slane %v982, 1
      %v984 = vadd.f32 %v982, %v983
      %v985 = vsel %vm293, %v913, 0.0
      %v986 = vrot.slane %v985, 4
      %v987 = vadd.f32 %v985, %v986
      %v988 = vrot.slane %v987, 2
      %v989 = vadd.f32 %v987, %v988
      %v990 = vrot.slane %v989, 1
      %v991 = vadd.f32 %v989, %v990
      %v992 = vsel %vm293, %v914, 0.0
      %v993 = vrot.slane %v992, 4
      %v994 = vadd.f32 %v992, %v993
      %v995 = vrot.slane %v994, 2
      %v996 = vadd.f32 %v994, %v995
      %v997 = vrot.slane %v996, 1
      %v998 = vadd.f32 %v996, %v997
      %v999 = vsel %vm293, %v919, 0.0
      %v1000 = vrot.slane %v999, 4
      %v1001 = vadd.f32 %v999, %v1000
      %v1002 = vrot.slane %v1001, 2
      %v1003 = vadd.f32 %v1001, %v1002
      %v1004 = vrot.slane %v1003, 1
      %v1005 = vadd.f32 %v1003, %v1004
      %v1006 = vsel %vm293, %v920, 0.0
      %v1007 = vrot.slane %v1006, 4
      %v1008 = vadd.f32 %v1006, %v1007
      %v1009 = vrot.slane %v1008, 2
      %v1010 = vadd.f32 %v1008, %v1009
      %v1011 = vrot.slane %v1010, 1
      %v1012 = vadd.f32 %v1010, %v1011
      %v1013 = vsel %vm293, %v921, 0.0
      %v1014 = vrot.slane %v1013, 4
      %v1015 = vadd.f32 %v1013, %v1014
      %v1016 = vrot.slane %v1015, 2
      %v1017 = vadd.f32 %v1015, %v1016
      %v1018 = vrot.slane %v1017, 1
      %v1019 = vadd.f32 %v1017, %v1018
      %v1020 = vsel %vm293, %v922, 0.0
      %v1021 = vrot.slane %v1020, 4
      %v1022 = vadd.f32 %v1020, %v1021
      %v1023 = vrot.slane %v1022, 2
      %v1024 = vadd.f32 %v1022, %v1023
      %v1025 = vrot.slane %v1024, 1
      %v1026 = vadd.f32 %v1024, %v1025
      %v1027 = vsel %vm293, %v923, 0.0
      %v1028 = vrot.slane %v1027, 4
      %v1029 = vadd.f32 %v1027, %v1028
      %v1030 = vrot.slane %v1029, 2
      %v1031 = vadd.f32 %v1029, %v1030
      %v1032 = vrot.slane %v1031, 1
      %v1033 = vadd.f32 %v1031, %v1032
      %v1034 = vsel %vm293, %v924, 0.0
      %v1035 = vrot.slane %v1034, 4
      %v1036 = vadd.f32 %v1034, %v1035
      %v1037 = vrot.slane %v1036, 2
      %v1038 = vadd.f32 %v1036, %v1037
      %v1039 = vrot.slane %v1038, 1
      %v1040 = vadd.f32 %v1038, %v1039
      %v1041 = vsel %vm293, %v925, 0.0
      %v1042 = vrot.slane %v1041, 4
      %v1043 = vadd.f32 %v1041, %v1042
      %v1044 = vrot.slane %v1043, 2
      %v1045 = vadd.f32 %v1043, %v1044
      %v1046 = vrot.slane %v1045, 1
      %v1047 = vadd.f32 %v1045, %v1046
      %v1048 = vsel %vm293, %v926, 0.0
      %v1049 = vrot.slane %v1048, 4
      %v1050 = vadd.f32 %v1048, %v1049
      %v1051 = vrot.slane %v1050, 2
      %v1052 = vadd.f32 %v1050, %v1051
      %v1053 = vrot.slane %v1052, 1
      %v1054 = vadd.f32 %v1052, %v1053
      %v1055 = vmul.f32 %v877, %v446
      %v1056 = vmul.f32 %v879, %v447
      %v1057 = vmul.f32 %v881, %v448
      %v1058 = vmul.f32 %v883, %v449
      %v1059 = vmul.f32 %v885, %v450
      %v1060 = vmul.f32 %v887, %v451
      %v1061 = vmul.f32 %v889, %v452
      %v1062 = vmul.f32 %v891, %v453
      %1071 = vst [vmem:[#allocation1] ss:$2 sm:$0xff] %v1055
      %s1072 = scalar_lea.vmem [#allocation1], 16
      %1073 = vst [vmem:[%s1072] ss:$2 sm:$0xff] %v1056
      %s1074 = scalar_lea.vmem [#allocation1], 32
      %1075 = vst [vmem:[%s1074] ss:$2 sm:$0xff] %v1057
      %s1076 = scalar_lea.vmem [#allocation1], 48
      %1077 = vst [vmem:[%s1076] ss:$2 sm:$0xff] %v1058
      %v1078 = vld.sshfl [vmem:[#allocation1] sm:$0xff pattern:$0x75316420]
      %v1079 = vld.sshfl [vmem:[#allocation1 + $0x8] sm:$0xff pattern:$0x75316420]
      %v1080 = vld.sshfl [vmem:[#allocation1 + $0x10] sm:$0xff pattern:$0x75316420]
      %v1081 = vld.sshfl [vmem:[#allocation1 + $0x18] sm:$0xff pattern:$0x75316420]
      %v1082 = vld.sshfl [vmem:[#allocation1 + $0x20] sm:$0xff pattern:$0x75316420]
      %v1083 = vld.sshfl [vmem:[#allocation1 + $0x28] sm:$0xff pattern:$0x75316420]
      %v1084 = vld.sshfl [vmem:[#allocation1 + $0x30] sm:$0xff pattern:$0x75316420]
      %v1085 = vld.sshfl [vmem:[#allocation1 + $0x38] sm:$0xff pattern:$0x75316420]
      %1086 = vst [vmem:[#allocation1] ss:$2 sm:$0xff] %v1059
      %1087 = vst [vmem:[%s1072] ss:$2 sm:$0xff] %v1060
      %1088 = vst [vmem:[%s1074] ss:$2 sm:$0xff] %v1061
      %1089 = vst [vmem:[%s1076] ss:$2 sm:$0xff] %v1062
      %v1090 = vld.sshfl [vmem:[#allocation1] sm:$0xff pattern:$0x75316420]
      %v1091 = vld.sshfl [vmem:[#allocation1 + $0x8] sm:$0xff pattern:$0x75316420]
      %v1092 = vld.sshfl [vmem:[#allocation1 + $0x10] sm:$0xff pattern:$0x75316420]
      %v1093 = vld.sshfl [vmem:[#allocation1 + $0x18] sm:$0xff pattern:$0x75316420]
      %v1094 = vld.sshfl [vmem:[#allocation1 + $0x20] sm:$0xff pattern:$0x75316420]
      %v1095 = vld.sshfl [vmem:[#allocation1 + $0x28] sm:$0xff pattern:$0x75316420]
      %v1096 = vld.sshfl [vmem:[#allocation1 + $0x30] sm:$0xff pattern:$0x75316420]
      %v1097 = vld.sshfl [vmem:[#allocation1 + $0x38] sm:$0xff pattern:$0x75316420]
      %v1114 = vsel %vm293, %v1078, 0.0
      %v1115 = vrot.slane %v1114, 4
      %v1116 = vadd.f32 %v1114, %v1115
      %v1117 = vrot.slane %v1116, 2
      %v1118 = vadd.f32 %v1116, %v1117
      %v1119 = vrot.slane %v1118, 1
      %v1120 = vadd.f32 %v1118, %v1119
      %v1121 = vsel %vm293, %v1079, 0.0
      %v1122 = vrot.slane %v1121, 4
      %v1123 = vadd.f32 %v1121, %v1122
      %v1124 = vrot.slane %v1123, 2
      %v1125 = vadd.f32 %v1123, %v1124
      %v1126 = vrot.slane %v1125, 1
      %v1127 = vadd.f32 %v1125, %v1126
      %v1128 = vsel %vm293, %v1080, 0.0
      %v1129 = vrot.slane %v1128, 4
      %v1130 = vadd.f32 %v1128, %v1129
      %v1131 = vrot.slane %v1130, 2
      %v1132 = vadd.f32 %v1130, %v1131
      %v1133 = vrot.slane %v1132, 1
      %v1134 = vadd.f32 %v1132, %v1133
      %v1135 = vsel %vm293, %v1081, 0.0
      %v1136 = vrot.slane %v1135, 4
      %v1137 = vadd.f32 %v1135, %v1136
      %v1138 = vrot.slane %v1137, 2
      %v1139 = vadd.f32 %v1137, %v1138
      %v1140 = vrot.slane %v1139, 1
      %v1141 = vadd.f32 %v1139, %v1140
      %v1142 = vsel %vm293, %v1082, 0.0
      %v1143 = vrot.slane %v1142, 4
      %v1144 = vadd.f32 %v1142, %v1143
      %v1145 = vrot.slane %v1144, 2
      %v1146 = vadd.f32 %v1144, %v1145
      %v1147 = vrot.slane %v1146, 1
      %v1148 = vadd.f32 %v1146, %v1147
      %v1149 = vsel %vm293, %v1083, 0.0
      %v1150 = vrot.slane %v1149, 4
      %v1151 = vadd.f32 %v1149, %v1150
      %v1152 = vrot.slane %v1151, 2
      %v1153 = vadd.f32 %v1151, %v1152
      %v1154 = vrot.slane %v1153, 1
      %v1155 = vadd.f32 %v1153, %v1154
      %v1156 = vsel %vm293, %v1084, 0.0
      %v1157 = vrot.slane %v1156, 4
      %v1158 = vadd.f32 %v1156, %v1157
      %v1159 = vrot.slane %v1158, 2
      %v1160 = vadd.f32 %v1158, %v1159
      %v1161 = vrot.slane %v1160, 1
      %v1162 = vadd.f32 %v1160, %v1161
      %v1163 = vsel %vm293, %v1085, 0.0
      %v1164 = vrot.slane %v1163, 4
      %v1165 = vadd.f32 %v1163, %v1164
      %v1166 = vrot.slane %v1165, 2
      %v1167 = vadd.f32 %v1165, %v1166
      %v1168 = vrot.slane %v1167, 1
      %v1169 = vadd.f32 %v1167, %v1168
      %v1170 = vsel %vm293, %v1090, 0.0
      %v1171 = vrot.slane %v1170, 4
      %v1172 = vadd.f32 %v1170, %v1171
      %v1173 = vrot.slane %v1172, 2
      %v1174 = vadd.f32 %v1172, %v1173
      %v1175 = vrot.slane %v1174, 1
      %v1176 = vadd.f32 %v1174, %v1175
      %v1177 = vsel %vm293, %v1091, 0.0
      %v1178 = vrot.slane %v1177, 4
      %v1179 = vadd.f32 %v1177, %v1178
      %v1180 = vrot.slane %v1179, 2
      %v1181 = vadd.f32 %v1179, %v1180
      %v1182 = vrot.slane %v1181, 1
      %v1183 = vadd.f32 %v1181, %v1182
      %v1184 = vsel %vm293, %v1092, 0.0
      %v1185 = vrot.slane %v1184, 4
      %v1186 = vadd.f32 %v1184, %v1185
      %v1187 = vrot.slane %v1186, 2
      %v1188 = vadd.f32 %v1186, %v1187
      %v1189 = vrot.slane %v1188, 1
      %v1190 = vadd.f32 %v1188, %v1189
      %v1191 = vsel %vm293, %v1093, 0.0
      %v1192 = vrot.slane %v1191, 4
      %v1193 = vadd.f32 %v1191, %v1192
      %v1194 = vrot.slane %v1193, 2
      %v1195 = vadd.f32 %v1193, %v1194
      %v1196 = vrot.slane %v1195, 1
      %v1197 = vadd.f32 %v1195, %v1196
      %v1198 = vsel %vm293, %v1094, 0.0
      %v1199 = vrot.slane %v1198, 4
      %v1200 = vadd.f32 %v1198, %v1199
      %v1201 = vrot.slane %v1200, 2
      %v1202 = vadd.f32 %v1200, %v1201
      %v1203 = vrot.slane %v1202, 1
      %v1204 = vadd.f32 %v1202, %v1203
      %v1205 = vsel %vm293, %v1095, 0.0
      %v1206 = vrot.slane %v1205, 4
      %v1207 = vadd.f32 %v1205, %v1206
      %v1208 = vrot.slane %v1207, 2
      %v1209 = vadd.f32 %v1207, %v1208
      %v1210 = vrot.slane %v1209, 1
      %v1211 = vadd.f32 %v1209, %v1210
      %v1212 = vsel %vm293, %v1096, 0.0
      %v1213 = vrot.slane %v1212, 4
      %v1214 = vadd.f32 %v1212, %v1213
      %v1215 = vrot.slane %v1214, 2
      %v1216 = vadd.f32 %v1214, %v1215
      %v1217 = vrot.slane %v1216, 1
      %v1218 = vadd.f32 %v1216, %v1217
      %v1219 = vsel %vm293, %v1097, 0.0
      %v1220 = vrot.slane %v1219, 4
      %v1221 = vadd.f32 %v1219, %v1220
      %v1222 = vrot.slane %v1221, 2
      %v1223 = vadd.f32 %v1221, %v1222
      %v1224 = vrot.slane %v1223, 1
      %v1225 = vadd.f32 %v1223, %v1224
      %v1226 = vrcp.pop %v949
      %v1227 = vmul.f32 %v949, %v1226
      %v1228 = vsub.f32 1.0, %v1227
      %v1229 = vmul.f32 %v1226, %v1228
      %v1230 = vadd.f32 %v1226, %v1229
      %vm1231 = vweird.f32 %v949
      %vm1232 = vweird.f32 %v1226
      %vm1233 = vmor %vm1231, %vm1232
      %v1234 = vsel %vm1233, %v1226, %v1230
      %v1235 = vand.u32 2147483647, %v949
      %vm1236 = vcmp.eq.f32.partialorder %v1235, 8.507059e+37
      %v1237 = vand.u32 %v949, 2147483648
      %v1238 = vor.u32 1.1754944e-38, %v1237
      %v1239 = vsel %vm1236, %v1238, %v1234
      %v1240 = vrcp.pop %v956
      %v1241 = vmul.f32 %v956, %v1240
      %v1242 = vsub.f32 1.0, %v1241
      %v1243 = vmul.f32 %v1240, %v1242
      %v1244 = vadd.f32 %v1240, %v1243
      %vm1245 = vweird.f32 %v956
      %vm1246 = vweird.f32 %v1240
      %vm1247 = vmor %vm1245, %vm1246
      %v1248 = vsel %vm1247, %v1240, %v1244
      %v1249 = vand.u32 2147483647, %v956
      %vm1250 = vcmp.eq.f32.partialorder %v1249, 8.507059e+37
      %v1251 = vand.u32 %v956, 2147483648
      %v1252 = vor.u32 1.1754944e-38, %v1251
      %v1253 = vsel %vm1250, %v1252, %v1248
      %v1254 = vrcp.pop %v963
      %v1255 = vmul.f32 %v963, %v1254
      %v1256 = vsub.f32 1.0, %v1255
      %v1257 = vmul.f32 %v1254, %v1256
      %v1258 = vadd.f32 %v1254, %v1257
      %vm1259 = vweird.f32 %v963
      %vm1260 = vweird.f32 %v1254
      %vm1261 = vmor %vm1259, %vm1260
      %v1262 = vsel %vm1261, %v1254, %v1258
      %v1263 = vand.u32 2147483647, %v963
      %vm1264 = vcmp.eq.f32.partialorder %v1263, 8.507059e+37
      %v1265 = vand.u32 %v963, 2147483648
      %v1266 = vor.u32 1.1754944e-38, %v1265
      %v1267 = vsel %vm1264, %v1266, %v1262
      %v1268 = vrcp.pop %v970
      %v1269 = vmul.f32 %v970, %v1268
      %v1270 = vsub.f32 1.0, %v1269
      %v1271 = vmul.f32 %v1268, %v1270
      %v1272 = vadd.f32 %v1268, %v1271
      %vm1273 = vweird.f32 %v970
      %vm1274 = vweird.f32 %v1268
      %vm1275 = vmor %vm1273, %vm1274
      %v1276 = vsel %vm1275, %v1268, %v1272
      %v1277 = vand.u32 2147483647, %v970
      %vm1278 = vcmp.eq.f32.partialorder %v1277, 8.507059e+37
      %v1279 = vand.u32 %v970, 2147483648
      %v1280 = vor.u32 1.1754944e-38, %v1279
      %v1281 = vsel %vm1278, %v1280, %v1276
      %v1282 = vrcp.pop %v977
      %v1283 = vmul.f32 %v977, %v1282
      %v1284 = vsub.f32 1.0, %v1283
      %v1285 = vmul.f32 %v1282, %v1284
      %v1286 = vadd.f32 %v1282, %v1285
      %vm1287 = vweird.f32 %v977
      %vm1288 = vweird.f32 %v1282
      %vm1289 = vmor %vm1287, %vm1288
      %v1290 = vsel %vm1289, %v1282, %v1286
      %v1291 = vand.u32 2147483647, %v977
      %vm1292 = vcmp.eq.f32.partialorder %v1291, 8.507059e+37
      %v1293 = vand.u32 %v977, 2147483648
      %v1294 = vor.u32 1.1754944e-38, %v1293
      %v1295 = vsel %vm1292, %v1294, %v1290
      %v1296 = vrcp.pop %v984
      %v1297 = vmul.f32 %v984, %v1296
      %v1298 = vsub.f32 1.0, %v1297
      %v1299 = vmul.f32 %v1296, %v1298
      %v1300 = vadd.f32 %v1296, %v1299
      %vm1301 = vweird.f32 %v984
      %vm1302 = vweird.f32 %v1296
      %vm1303 = vmor %vm1301, %vm1302
      %v1304 = vsel %vm1303, %v1296, %v1300
      %v1305 = vand.u32 2147483647, %v984
      %vm1306 = vcmp.eq.f32.partialorder %v1305, 8.507059e+37
      %v1307 = vand.u32 %v984, 2147483648
      %v1308 = vor.u32 1.1754944e-38, %v1307
      %v1309 = vsel %vm1306, %v1308, %v1304
      %v1310 = vrcp.pop %v991
      %v1311 = vmul.f32 %v991, %v1310
      %v1312 = vsub.f32 1.0, %v1311
      %v1313 = vmul.f32 %v1310, %v1312
      %v1314 = vadd.f32 %v1310, %v1313
      %vm1315 = vweird.f32 %v991
      %vm1316 = vweird.f32 %v1310
      %vm1317 = vmor %vm1315, %vm1316
      %v1318 = vsel %vm1317, %v1310, %v1314
      %v1319 = vand.u32 2147483647, %v991
      %vm1320 = vcmp.eq.f32.partialorder %v1319, 8.507059e+37
      %v1321 = vand.u32 %v991, 2147483648
      %v1322 = vor.u32 1.1754944e-38, %v1321
      %v1323 = vsel %vm1320, %v1322, %v1318
      %v1324 = vrcp.pop %v998
      %v1325 = vmul.f32 %v998, %v1324
      %v1326 = vsub.f32 1.0, %v1325
      %v1327 = vmul.f32 %v1324, %v1326
      %v1328 = vadd.f32 %v1324, %v1327
      %vm1329 = vweird.f32 %v998
      %vm1330 = vweird.f32 %v1324
      %vm1331 = vmor %vm1329, %vm1330
      %v1332 = vsel %vm1331, %v1324, %v1328
      %v1333 = vand.u32 2147483647, %v998
      %vm1334 = vcmp.eq.f32.partialorder %v1333, 8.507059e+37
      %v1335 = vand.u32 %v998, 2147483648
      %v1336 = vor.u32 1.1754944e-38, %v1335
      %v1337 = vsel %vm1334, %v1336, %v1332
      %v1338 = vrcp.pop %v1005
      %v1339 = vmul.f32 %v1005, %v1338
      %v1340 = vsub.f32 1.0, %v1339
      %v1341 = vmul.f32 %v1338, %v1340
      %v1342 = vadd.f32 %v1338, %v1341
      %vm1343 = vweird.f32 %v1005
      %vm1344 = vweird.f32 %v1338
      %vm1345 = vmor %vm1343, %vm1344
      %v1346 = vsel %vm1345, %v1338, %v1342
      %v1347 = vand.u32 2147483647, %v1005
      %vm1348 = vcmp.eq.f32.partialorder %v1347, 8.507059e+37
      %v1349 = vand.u32 %v1005, 2147483648
      %v1350 = vor.u32 1.1754944e-38, %v1349
      %v1351 = vsel %vm1348, %v1350, %v1346
      %v1352 = vrcp.pop %v1012
      %v1353 = vmul.f32 %v1012, %v1352
      %v1354 = vsub.f32 1.0, %v1353
      %v1355 = vmul.f32 %v1352, %v1354
      %v1356 = vadd.f32 %v1352, %v1355
      %vm1357 = vweird.f32 %v1012
      %vm1358 = vweird.f32 %v1352
      %vm1359 = vmor %vm1357, %vm1358
      %v1360 = vsel %vm1359, %v1352, %v1356
      %v1361 = vand.u32 2147483647, %v1012
      %vm1362 = vcmp.eq.f32.partialorder %v1361, 8.507059e+37
      %v1363 = vand.u32 %v1012, 2147483648
      %v1364 = vor.u32 1.1754944e-38, %v1363
      %v1365 = vsel %vm1362, %v1364, %v1360
      %v1366 = vrcp.pop %v1019
      %v1367 = vmul.f32 %v1019, %v1366
      %v1368 = vsub.f32 1.0, %v1367
      %v1369 = vmul.f32 %v1366, %v1368
      %v1370 = vadd.f32 %v1366, %v1369
      %vm1371 = vweird.f32 %v1019
      %vm1372 = vweird.f32 %v1366
      %vm1373 = vmor %vm1371, %vm1372
      %v1374 = vsel %vm1373, %v1366, %v1370
      %v1375 = vand.u32 2147483647, %v1019
      %vm1376 = vcmp.eq.f32.partialorder %v1375, 8.507059e+37
      %v1377 = vand.u32 %v1019, 2147483648
      %v1378 = vor.u32 1.1754944e-38, %v1377
      %v1379 = vsel %vm1376, %v1378, %v1374
      %v1380 = vrcp.pop %v1026
      %v1381 = vmul.f32 %v1026, %v1380
      %v1382 = vsub.f32 1.0, %v1381
      %v1383 = vmul.f32 %v1380, %v1382
      %v1384 = vadd.f32 %v1380, %v1383
      %vm1385 = vweird.f32 %v1026
      %vm1386 = vweird.f32 %v1380
      %vm1387 = vmor %vm1385, %vm1386
      %v1388 = vsel %vm1387, %v1380, %v1384
      %v1389 = vand.u32 2147483647, %v1026
      %vm1390 = vcmp.eq.f32.partialorder %v1389, 8.507059e+37
      %v1391 = vand.u32 %v1026, 2147483648
      %v1392 = vor.u32 1.1754944e-38, %v1391
      %v1393 = vsel %vm1390, %v1392, %v1388
      %v1394 = vrcp.pop %v1033
      %v1395 = vmul.f32 %v1033, %v1394
      %v1396 = vsub.f32 1.0, %v1395
      %v1397 = vmul.f32 %v1394, %v1396
      %v1398 = vadd.f32 %v1394, %v1397
      %vm1399 = vweird.f32 %v1033
      %vm1400 = vweird.f32 %v1394
      %vm1401 = vmor %vm1399, %vm1400
      %v1402 = vsel %vm1401, %v1394, %v1398
      %v1403 = vand.u32 2147483647, %v1033
      %vm1404 = vcmp.eq.f32.partialorder %v1403, 8.507059e+37
      %v1405 = vand.u32 %v1033, 2147483648
      %v1406 = vor.u32 1.1754944e-38, %v1405
      %v1407 = vsel %vm1404, %v1406, %v1402
      %v1408 = vrcp.pop %v1040
      %v1409 = vmul.f32 %v1040, %v1408
      %v1410 = vsub.f32 1.0, %v1409
      %v1411 = vmul.f32 %v1408, %v1410
      %v1412 = vadd.f32 %v1408, %v1411
      %vm1413 = vweird.f32 %v1040
      %vm1414 = vweird.f32 %v1408
      %vm1415 = vmor %vm1413, %vm1414
      %v1416 = vsel %vm1415, %v1408, %v1412
      %v1417 = vand.u32 2147483647, %v1040
      %vm1418 = vcmp.eq.f32.partialorder %v1417, 8.507059e+37
      %v1419 = vand.u32 %v1040, 2147483648
      %v1420 = vor.u32 1.1754944e-38, %v1419
      %v1421 = vsel %vm1418, %v1420, %v1416
      %v1422 = vrcp.pop %v1047
      %v1423 = vmul.f32 %v1047, %v1422
      %v1424 = vsub.f32 1.0, %v1423
      %v1425 = vmul.f32 %v1422, %v1424
      %v1426 = vadd.f32 %v1422, %v1425
      %vm1427 = vweird.f32 %v1047
      %vm1428 = vweird.f32 %v1422
      %vm1429 = vmor %vm1427, %vm1428
      %v1430 = vsel %vm1429, %v1422, %v1426
      %v1431 = vand.u32 2147483647, %v1047
      %vm1432 = vcmp.eq.f32.partialorder %v1431, 8.507059e+37
      %v1433 = vand.u32 %v1047, 2147483648
      %v1434 = vor.u32 1.1754944e-38, %v1433
      %v1435 = vsel %vm1432, %v1434, %v1430
      %v1436 = vrcp.pop %v1054
      %v1437 = vmul.f32 %v1054, %v1436
      %v1438 = vsub.f32 1.0, %v1437
      %v1439 = vmul.f32 %v1436, %v1438
      %v1440 = vadd.f32 %v1436, %v1439
      %vm1441 = vweird.f32 %v1054
      %vm1442 = vweird.f32 %v1436
      %vm1443 = vmor %vm1441, %vm1442
      %v1444 = vsel %vm1443, %v1436, %v1440
      %v1445 = vand.u32 2147483647, %v1054
      %vm1446 = vcmp.eq.f32.partialorder %v1445, 8.507059e+37
      %v1447 = vand.u32 %v1054, 2147483648
      %v1448 = vor.u32 1.1754944e-38, %v1447
      %v1449 = vsel %vm1446, %v1448, %v1444
      %v1450 = vmul.f32 %v1120, %v1239
      %v1451 = vmul.f32 %v1127, %v1253
      %v1452 = vmul.f32 %v1134, %v1267
      %v1453 = vmul.f32 %v1141, %v1281
      %v1454 = vmul.f32 %v1148, %v1295
      %v1455 = vmul.f32 %v1155, %v1309
      %v1456 = vmul.f32 %v1162, %v1323
      %v1457 = vmul.f32 %v1169, %v1337
      %v1458 = vmul.f32 %v1176, %v1351
      %v1459 = vmul.f32 %v1183, %v1365
      %v1460 = vmul.f32 %v1190, %v1379
      %v1461 = vmul.f32 %v1197, %v1393
      %v1462 = vmul.f32 %v1204, %v1407
      %v1463 = vmul.f32 %v1211, %v1421
      %v1464 = vmul.f32 %v1218, %v1435
      %v1465 = vmul.f32 %v1225, %v1449
      %v1466 = vsub.f32 %v634, %v1450
      %v1467 = vsub.f32 %v636, %v1451
      %v1468 = vsub.f32 %v638, %v1452
      %v1469 = vsub.f32 %v640, %v1453
      %v1470 = vsub.f32 %v642, %v1454
      %v1471 = vsub.f32 %v644, %v1455
      %v1472 = vsub.f32 %v646, %v1456
      %v1473 = vsub.f32 %v648, %v1457
      %v1474 = vsub.f32 %v650, %v1458
      %v1475 = vsub.f32 %v652, %v1459
      %v1476 = vsub.f32 %v654, %v1460
      %v1477 = vsub.f32 %v656, %v1461
      %v1478 = vsub.f32 %v658, %v1462
      %v1479 = vsub.f32 %v660, %v1463
      %v1480 = vsub.f32 %v662, %v1464
      %v1481 = vsub.f32 %v664, %v1465
      %v1482 = vlaneseq
      %v1483 = vand.u32 %v1482, 127
      %v1484 = vadd.s32 %v1483, 128
      %v1485 = vadd.s32 %v1483, 256
      %v1486 = vadd.s32 %v1483, 384
      %v1487 = vadd.s32 %v1483, 512
      %v1488 = vadd.s32 %v1483, 640
      %v1489 = vadd.s32 %v1483, 768
      %v1490 = vadd.s32 %v1483, 896
      %v1491 = vadd.s32 %v1483, 1024
      %v1492 = vadd.s32 %v1483, 1152
      %v1493 = vadd.s32 %v1483, 1280
      %v1494 = vadd.s32 %v1483, 1408
      %v1495 = vadd.s32 %v1483, 1536
      %v1496 = vadd.s32 %v1483, 1664
      %v1497 = vadd.s32 %v1483, 1792
      %v1498 = vadd.s32 %v1483, 1920
      %s1499 = smul.u32 %s18, 2048
      %v1500 = vstv %s1499
      %v1501 = vadd.s32 %v1500, %v1483
      %v1502 = vadd.s32 %v1500, %v1484
      %v1503 = vadd.s32 %v1500, %v1485
      %v1504 = vadd.s32 %v1500, %v1486
      %v1505 = vadd.s32 %v1500, %v1487
      %v1506 = vadd.s32 %v1500, %v1488
      %v1507 = vadd.s32 %v1500, %v1489
      %v1508 = vadd.s32 %v1500, %v1490
      %v1509 = vadd.s32 %v1500, %v1491
      %v1510 = vadd.s32 %v1500, %v1492
      %v1511 = vadd.s32 %v1500, %v1493
      %v1512 = vadd.s32 %v1500, %v1494
      %v1513 = vadd.s32 %v1500, %v1495
      %v1514 = vadd.s32 %v1500, %v1496
      %v1515 = vadd.s32 %v1500, %v1497
      %v1516 = vadd.s32 %v1500, %v1498
      %vm1517 = vcmp.lt.s32.totalorder %v1501, 2048
      %vm1518 = vcmp.lt.s32.totalorder %v1502, 2048
      %vm1519 = vcmp.lt.s32.totalorder %v1503, 2048
      %vm1520 = vcmp.lt.s32.totalorder %v1504, 2048
      %vm1521 = vcmp.lt.s32.totalorder %v1505, 2048
      %vm1522 = vcmp.lt.s32.totalorder %v1506, 2048
      %vm1523 = vcmp.lt.s32.totalorder %v1507, 2048
      %vm1524 = vcmp.lt.s32.totalorder %v1508, 2048
      %vm1525 = vcmp.lt.s32.totalorder %v1509, 2048
      %vm1526 = vcmp.lt.s32.totalorder %v1510, 2048
      %vm1527 = vcmp.lt.s32.totalorder %v1511, 2048
      %vm1528 = vcmp.lt.s32.totalorder %v1512, 2048
      %vm1529 = vcmp.lt.s32.totalorder %v1513, 2048
      %vm1530 = vcmp.lt.s32.totalorder %v1514, 2048
      %vm1531 = vcmp.lt.s32.totalorder %v1515, 2048
      %vm1532 = vcmp.lt.s32.totalorder %v1516, 2048
      %v1533 = vld [vmem:[#allocation2] sm:$0xff]
      %v1534 = vld [vmem:[#allocation2 + $0x8] sm:$0xff]
      %v1535 = vsel %vm1517, %v1466, 0.0
      %v1536 = vsel %vm1518, %v1467, 0.0
      %v1537 = vsel %vm1519, %v1468, 0.0
      %v1538 = vsel %vm1520, %v1469, 0.0
      %v1539 = vsel %vm1521, %v1470, 0.0
      %v1540 = vsel %vm1522, %v1471, 0.0
      %v1541 = vsel %vm1523, %v1472, 0.0
      %v1542 = vsel %vm1524, %v1473, 0.0
      %v1543 = vsel %vm1525, %v1474, 0.0
      %v1544 = vsel %vm1526, %v1475, 0.0
      %v1545 = vsel %vm1527, %v1476, 0.0
      %v1546 = vsel %vm1528, %v1477, 0.0
      %v1547 = vsel %vm1529, %v1478, 0.0
      %v1548 = vsel %vm1530, %v1479, 0.0
      %v1549 = vsel %vm1531, %v1480, 0.0
      %v1550 = vsel %vm1532, %v1481, 0.0
      %v1567 = vrot.slane %v1536, 7
      %v1568 = vrot.slane %v1537, 6
      %v1569 = vrot.slane %v1538, 5
      %v1570 = vrot.slane %v1539, 4
      %v1571 = vrot.slane %v1540, 3
      %v1572 = vrot.slane %v1541, 2
      %v1573 = vrot.slane %v1542, 1
      %v1574 = vrot.slane %v1544, 7
      %v1575 = vrot.slane %v1545, 6
      %v1576 = vrot.slane %v1546, 5
      %v1577 = vrot.slane %v1547, 4
      %v1578 = vrot.slane %v1548, 3
      %v1579 = vrot.slane %v1549, 2
      %v1580 = vrot.slane %v1550, 1
      %vm1581 = vcmask 1040384
      %v1582 = vsel %vm1581, %v1535, %v1567
      %vm1583 = vcmask 1042434
      %v1584 = vsel %vm1583, %v1568, %v1569
      %vm1585 = vcmask 1041408
      %v1586 = vsel %vm1585, %v1582, %v1584
      %vm1587 = vcmask 1044484
      %v1588 = vsel %vm1587, %v1570, %v1571
      %vm1589 = vcmask 1046534
      %v1590 = vsel %vm1589, %v1572, %v1573
      %vm1591 = vcmask 1045508
      %v1592 = vsel %vm1591, %v1588, %v1590
      %v1593 = vsel %vm293, %v1586, %v1592
      %v1594 = vsel %vm1581, %v1543, %v1574
      %v1595 = vsel %vm1583, %v1575, %v1576
      %v1596 = vsel %vm1585, %v1594, %v1595
      %v1597 = vsel %vm1587, %v1577, %v1578
      %v1598 = vsel %vm1589, %v1579, %v1580
      %v1599 = vsel %vm1591, %v1597, %v1598
      %v1600 = vsel %vm293, %v1596, %v1599
      %v1603 = vadd.f32 %v1533, %v1593
      %v1604 = vadd.f32 %v1534, %v1600
      %1605 = vst [vmem:[#allocation2] sm:$0xff] %v1603
      %1606 = vst [vmem:[#allocation2 + $0x8] sm:$0xff] %v1604
      // Predicated region
      $region33: #{distillation_loss.1} parent=27 // pred_check
        %p1607 = pneg %p204
      $region34: #{distillation_loss.1} parent=27 // pred_check_branch
        %1609 = sbr.rel (%p1607) target = $region36
      $region35: #{distillation_loss.1} parent=27 // pred_region
        %v1610 = vld [vmem:[#allocation2] sm:$0xff]
        %v1611 = vld [vmem:[#allocation2 + $0x8] sm:$0xff]
        %v1614 = vperm.slane %v1610, 0
        %v1615 = vperm.slane %v1610, 1
        %v1616 = vperm.slane %v1610, 2
        %v1617 = vperm.slane %v1610, 3
        %v1618 = vperm.slane %v1610, 4
        %v1619 = vperm.slane %v1610, 5
        %v1620 = vperm.slane %v1610, 6
        %v1621 = vperm.slane %v1610, 7
        %v1622 = vperm.slane %v1611, 0
        %v1623 = vperm.slane %v1611, 1
        %v1624 = vperm.slane %v1611, 2
        %v1625 = vperm.slane %v1611, 3
        %v1626 = vperm.slane %v1611, 4
        %v1627 = vperm.slane %v1611, 5
        %v1628 = vperm.slane %v1611, 6
        %v1629 = vperm.slane %v1611, 7
        %v1646 = vsel %vm1581, %v1614, 0.0
        %v1647 = vsel %vm1581, %v1615, 0.0
        %v1648 = vadd.f32 %v1646, %v1647
        %v1649 = vsel %vm1581, %v1616, 0.0
        %v1650 = vadd.f32 %v1648, %v1649
        %v1651 = vsel %vm1581, %v1617, 0.0
        %v1652 = vadd.f32 %v1650, %v1651
        %v1653 = vsel %vm1581, %v1618, 0.0
        %v1654 = vadd.f32 %v1652, %v1653
        %v1655 = vsel %vm1581, %v1619, 0.0
        %v1656 = vadd.f32 %v1654, %v1655
        %v1657 = vsel %vm1581, %v1620, 0.0
        %v1658 = vadd.f32 %v1656, %v1657
        %v1659 = vsel %vm1581, %v1621, 0.0
        %v1660 = vadd.f32 %v1658, %v1659
        %v1661 = vsel %vm1581, %v1622, 0.0
        %v1662 = vadd.f32 %v1660, %v1661
        %v1663 = vsel %vm1581, %v1623, 0.0
        %v1664 = vadd.f32 %v1662, %v1663
        %v1665 = vsel %vm1581, %v1624, 0.0
        %v1666 = vadd.f32 %v1664, %v1665
        %v1667 = vsel %vm1581, %v1625, 0.0
        %v1668 = vadd.f32 %v1666, %v1667
        %v1669 = vsel %vm1581, %v1626, 0.0
        %v1670 = vadd.f32 %v1668, %v1669
        %v1671 = vsel %vm1581, %v1627, 0.0
        %v1672 = vadd.f32 %v1670, %v1671
        %v1673 = vsel %vm1581, %v1628, 0.0
        %v1674 = vadd.f32 %v1672, %v1673
        %v1675 = vsel %vm1581, %v1629, 0.0
        %v1676 = vadd.f32 %v1674, %v1675
        %1677 = vadd.xlane.f32.xlu0 %v1676
        %v1678 = vpop.xlane.xlu0 %1677
        %v1679 = vrot.slane %v1678, 4
        %v1680 = vadd.f32 %v1678, %v1679
        %v1681 = vrot.slane %v1680, 2
        %v1682 = vadd.f32 %v1680, %v1681
        %v1683 = vrot.slane %v1682, 1
        %v1684 = vadd.f32 %v1682, %v1683
        %s1685 = vtos %v1684
        %v1686 = vstv %s1685
        %1687 = vst [vmem:[%s203] sm:$0x1] %v1686
      $region36: #{distillation_loss.1} parent=27 // pred_fallthru
        _
      %p1688 = scmp.lt.s32.totalorder %s17, 1
      %s1689 = scalar_select %p1688, %s17, 1
      %s1690 = scalar_lea.vmem %s2, %s1689
      // Predicated region
      $region37: #{distillation_loss.1} parent=27 // pred_check
        %p1691 = pneg %p99
      $region38: #{distillation_loss.1} parent=27 // pred_check_branch
        %1693 = sbr.rel (%p1691) target = $region40
      $region39: #{distillation_loss.1} parent=27 // pred_region
        _
      $region40: #{distillation_loss.1} parent=27 // pred_fallthru
        _
    $region28: #{distillation_loss.1} parent=5 // pred_fallthru
      _
    %p1694 = scmp.le.s32.totalorder 2, %s8
    // Predicated region
    $region41: #{distillation_loss.1} parent=5 // pred_check
      %p1695 = pneg %p1694
    $region42: #{distillation_loss.1} parent=5 // pred_check_branch
      %1697 = sbr.rel (%p1695) target = $region44
    $region43: #{distillation_loss.1} parent=5 // pred_region
      %s1698 = ssub.s32 %s8, 2
      // Predicated region
      $region45: #{distillation_loss.1} parent=43 // pred_check
        %p1699 = pneg %p105
      $region46: #{distillation_loss.1} parent=43 // pred_check_branch
        %1701 = sbr.rel (%p1699) target = $region48
      $region47: #{distillation_loss.1} parent=43 // pred_region
        %p1702 = scmp.lt.s32.totalorder %s19, 1
        %s1703 = scalar_select %p1702, %s19, 1
        %s1704 = scalar_lea.vmem %s2, %s1703
      $region48: #{distillation_loss.1} parent=43 // pred_fallthru
        _
    $region44: #{distillation_loss.1} parent=5 // pred_fallthru
      _
  $region6: #{distillation_loss.1} parent=0 // loop_footer
    %s12 = sadd.s32 1, %s8
  $region7: #{distillation_loss.1} parent=0 // loop_footer_branch
    %7 = sbr.rel target = $region3
  $region8: #{distillation_loss.1} parent=0 // loop_exit
    _

</llo_original>
